<compile_context>
chip_gen: v6e
topology: v6e:2x2x1
jax: 0.10.0
libtpu: 0.0.40
codegen_flags: <defaults>
</compile_context>

<pallas_src>
import jax
import jax.numpy as jnp
from jax import lax
from jax.experimental import pallas as pl
from jax.experimental.pallas import tpu as pltpu


def _round_up(x, m):
    return ((x + m - 1) // m) * m


# ---------------------------------------------------------------------------
# Shared LSTM cell step (traced inside kernels).  gx_t already contains
# x_t @ W_ih + b; only the recurrent matmul runs here (bf16 inputs, f32 acc).
# ---------------------------------------------------------------------------
def _lstm_step(gx_t, h, c, whh_bf16, H):
    gates = gx_t + jnp.dot(h.astype(jnp.bfloat16), whh_bf16,
                           preferred_element_type=jnp.float32)       # [N, 4H]
    i = jax.nn.sigmoid(gates[:, 0 * H:1 * H])
    f = jax.nn.sigmoid(gates[:, 1 * H:2 * H])
    g = jnp.tanh(gates[:, 2 * H:3 * H])
    o = jax.nn.sigmoid(gates[:, 3 * H:4 * H])
    c_new = f * c + i * g
    h_new = o * jnp.tanh(c_new)
    return h_new, c_new


# ---------------------------------------------------------------------------
# Word-level LSTM: only the final hidden state is produced.  Grid over N-chunks
# (independent sentences -> "parallel"); time loop inside the kernel.
# ---------------------------------------------------------------------------
def _lstm_last_kernel(len_ref, gx_ref, whh_ref, hlast_ref):
    T, NB, _ = gx_ref.shape
    H = whh_ref.shape[0]
    lens = len_ref[...]                                   # [NB, 1] int32
    whh = whh_ref[...]                                    # [H, 4H] bf16 (hoisted load)

    def body(t, carry):
        h, c = carry
        gx_t = gx_ref[t].astype(jnp.float32)              # [NB, 4H]
        h_new, c_new = _lstm_step(gx_t, h, c, whh, H)
        valid = lens > t                                  # [NB, 1] bool
        return (jnp.where(valid, h_new, h), jnp.where(valid, c_new, c))

    h0 = jnp.zeros((NB, H), jnp.float32)
    c0 = jnp.zeros((NB, H), jnp.float32)
    h_last, _ = lax.fori_loop(0, T, body, (h0, c0))
    hlast_ref[...] = h_last


def lstm_last(gx, lengths, whh):
    """gx: [T, N, 4H] f32 (precomputed x@W_ih + b); lengths: [N] int32;
    whh: [H, 4H] f32.  Returns h_last [N, H] f32."""
    T, N, G4 = gx.shape
    H = whh.shape[0]
    nb = min(_round_up(N, 8), 128)          # N-chunk: VMEM residency + megacore sharding
    Np = _round_up(max(N, nb), nb)
    if Np != N:
        gx = jnp.pad(gx, ((0, 0), (0, Np - N), (0, 0)))
        lengths = jnp.pad(lengths, (0, Np - N))
    lens2 = lengths.reshape(Np, 1).astype(jnp.int32)
    whh_b = whh.astype(jnp.bfloat16)

    grid_spec = pltpu.PrefetchScalarGridSpec(
        num_scalar_prefetch=0,
        grid=(Np // nb,),
        in_specs=[
            pl.BlockSpec((nb, 1), lambda i: (i, 0)),       # lengths
            pl.BlockSpec((T, nb, G4), lambda i: (0, i, 0)),  # precomputed gate inputs
            pl.BlockSpec((H, G4), lambda i: (0, 0)),       # W_hh (grid-invariant)
        ],
        out_specs=pl.BlockSpec((nb, H), lambda i: (i, 0)),
    )
    h_last = pl.pallas_call(
        _lstm_last_kernel,
        out_shape=jax.ShapeDtypeStruct((Np, H), jnp.float32),
        grid_spec=grid_spec,
        compiler_params=pltpu.CompilerParams(dimension_semantics=("parallel",)),
    )(lens2, gx, whh_b)
    return h_last[:N]


# ---------------------------------------------------------------------------
# Doc-level LSTM for the generator, with the z head fused in
# (H->1 projection as VPU multiply + lane reduction, sigmoid, threshold, mask).
# ---------------------------------------------------------------------------
def _doc_gen_kernel(len_ref, gx_ref, whh_ref, zw_ref, zb_ref, z_ref, hall_sc):
    S, B, _ = gx_ref.shape
    H = whh_ref.shape[0]
    lens = len_ref[...]                                   # [B, 1] int32
    whh = whh_ref[...]

    def body(t, carry):
        h, c = carry
        gx_t = gx_ref[t].astype(jnp.float32)
        h_new, c_new = _lstm_step(gx_t, h, c, whh, H)
        valid = lens > t
        h = jnp.where(valid, h_new, h)
        c = jnp.where(valid, c_new, c)
        hall_sc[t] = h                                    # per-step doc hidden state
        return (h, c)

    h0 = jnp.zeros((B, H), jnp.float32)
    c0 = jnp.zeros((B, H), jnp.float32)
    lax.fori_loop(0, S, body, (h0, c0))

    hall = hall_sc[...]                                   # [S, B, H]
    logits = jnp.sum(hall * zw_ref[...][None, :, :], axis=-1) + zb_ref[...]  # [S, B]
    prob = jax.nn.sigmoid(logits)
    step = lax.broadcasted_iota(jnp.int32, (S, B), 0)
    doc_mask = step < lens[:, 0][None, :]                 # [S, B]
    # TODO(synk): training-time Bernoulli sampling (REINFORCE) replaced by the
    # deterministic eval-mode decision rule z = 1[p >= 0.5].
    z_ref[...] = jnp.logical_and(prob >= 0.5, doc_mask).astype(jnp.float32)


def doc_generator(gx, doc_lengths, whh, z_w, z_b):
    """gx: [S, B, 4H] f32; doc_lengths: [B] int32.  Returns z [B, S] f32 in {0,1}."""
    S, B, _ = gx.shape
    H = whh.shape[0]
    Bp = _round_up(max(B, 8), 8)
    if Bp != B:
        gx = jnp.pad(gx, ((0, 0), (0, Bp - B), (0, 0)))
        doc_lengths = jnp.pad(doc_lengths, (0, Bp - B))
    lens2 = doc_lengths.reshape(Bp, 1).astype(jnp.int32)
    z = pl.pallas_call(
        _doc_gen_kernel,
        out_shape=jax.ShapeDtypeStruct((S, Bp), jnp.float32),
        scratch_shapes=[pltpu.VMEM((S, Bp, H), jnp.float32)],
    )(lens2, gx, whh.astype(jnp.bfloat16), z_w.reshape(1, H), z_b.reshape(1, 1))
    return z[:, :B].T                                     # [B, S]


# ---------------------------------------------------------------------------
# Doc-level LSTM for the encoder, with the output head (Linear + sigmoid) fused.
# ---------------------------------------------------------------------------
def _doc_enc_kernel(len_ref, gx_ref, whh_ref, ow_ref, ob_ref, y_ref):
    S, B, _ = gx_ref.shape
    H = whh_ref.shape[0]
    lens = len_ref[...]
    whh = whh_ref[...]

    def body(t, carry):
        h, c = carry
        gx_t = gx_ref[t].astype(jnp.float32)
        h_new, c_new = _lstm_step(gx_t, h, c, whh, H)
        valid = lens > t
        return (jnp.where(valid, h_new, h), jnp.where(valid, c_new, c))

    h0 = jnp.zeros((B, H), jnp.float32)
    c0 = jnp.zeros((B, H), jnp.float32)
    h_last, _ = lax.fori_loop(0, S, body, (h0, c0))
    y_ref[...] = jax.nn.sigmoid(
        jnp.dot(h_last, ow_ref[...], preferred_element_type=jnp.float32) + ob_ref[...])


def doc_encoder(gx, doc_lengths, whh, out_w, out_b):
    S, B, _ = gx.shape
    n_out = out_w.shape[1]
    Bp = _round_up(max(B, 8), 8)
    if Bp != B:
        gx = jnp.pad(gx, ((0, 0), (0, Bp - B), (0, 0)))
        doc_lengths = jnp.pad(doc_lengths, (0, Bp - B))
    lens2 = doc_lengths.reshape(Bp, 1).astype(jnp.int32)
    y = pl.pallas_call(
        _doc_enc_kernel,
        out_shape=jax.ShapeDtypeStruct((Bp, n_out), jnp.float32),
    )(lens2, gx, whh.astype(jnp.bfloat16), out_w, out_b)
    return y[:B]


# ---------------------------------------------------------------------------
# Dense Pallas kernel (used only for the hoisted input projections).
# ---------------------------------------------------------------------------
def _dense_kernel(x_ref, w_ref, b_ref, o_ref):
    o_ref[...] = (jnp.dot(x_ref[...], w_ref[...],
                          preferred_element_type=jnp.float32) + b_ref[...])


def dense(x, w, b=None):
    M, K = x.shape
    N = w.shape[1]
    if b is None:
        b = jnp.zeros((1, N), jnp.float32)
    Mp = _round_up(max(M, 8), 8)
    xp = jnp.pad(x, ((0, Mp - M), (0, 0))) if Mp != M else x
    out = pl.pallas_call(
        _dense_kernel,
        out_shape=jax.ShapeDtypeStruct((Mp, N), jnp.float32),
    )(xp, w, b)
    return out[:M]


# ---------------------------------------------------------------------------
# Parameters (deterministic synthetic init).
# ---------------------------------------------------------------------------
def init_params(key, vocab_size, emb_dim, hidden, n_out):
    keys = jax.random.split(key, 16)
    s = 0.1

    def w(k, shape):
        return (s * jax.random.normal(k, shape)).astype(jnp.float32)

    return {
        # generator
        "gen_emb": w(keys[0], (vocab_size, emb_dim)),
        "gen_sent_wih": w(keys[1], (emb_dim, 4 * hidden)),
        "gen_sent_whh": w(keys[2], (hidden, 4 * hidden)),
        "gen_sent_b": w(keys[3], (1, 4 * hidden)),
        "gen_doc_wih": w(keys[4], (hidden, 4 * hidden)),
        "gen_doc_whh": w(keys[5], (hidden, 4 * hidden)),
        "gen_doc_b": w(keys[6], (1, 4 * hidden)),
        "z_w": w(keys[7], (hidden, 1)),
        "z_b": jnp.zeros((1, 1), jnp.float32),
        # encoder
        "enc_emb": w(keys[8], (vocab_size, emb_dim)),
        "enc_sent_wih": w(keys[9], (emb_dim, 4 * hidden)),
        "enc_sent_whh": w(keys[10], (hidden, 4 * hidden)),
        "enc_sent_b": w(keys[11], (1, 4 * hidden)),
        "enc_doc_wih": w(keys[12], (hidden, 4 * hidden)),
        "enc_doc_whh": w(keys[13], (hidden, 4 * hidden)),
        "enc_doc_b": w(keys[14], (1, 4 * hidden)),
        "out_w": w(keys[15], (hidden, n_out)),
        "out_b": jnp.zeros((1, n_out), jnp.float32),
    }


# ---------------------------------------------------------------------------
# Generator / Encoder / RLModel.forward
# ---------------------------------------------------------------------------
def generator_forward(p, docs, doc_lengths, sent_lengths, tables):
    B, S, T = docs.shape
    H = p["gen_doc_whh"].shape[0]
    # Word level: per-token gate pre-activations gathered from the hoisted
    # [vocab, 4H] projection table (embedding gather is plain-JAX glue).
    gx_tok = tables["gen_word"][docs] + p["gen_sent_b"][0]            # [B,S,T,4H]
    gx_word = gx_tok.reshape(B * S, T, 4 * H).transpose(1, 0, 2)      # [T, B*S, 4H]
    sent_h = lstm_last(gx_word, sent_lengths.reshape(B * S), p["gen_sent_whh"])
    # Doc level: hoist the doc input projection, then run LSTM + fused z head.
    feats = sent_h.reshape(B, S, H).transpose(1, 0, 2)                # [S, B, H]
    gx_doc = dense(feats.reshape(S * B, H), p["gen_doc_wih"],
                   p["gen_doc_b"]).reshape(S, B, 4 * H)
    z = doc_generator(gx_doc, doc_lengths, p["gen_doc_whh"], p["z_w"], p["z_b"])
    return z                                                          # [B, S]


def encoder_forward(p, docs, doc_lengths, sent_lengths, z, tables):
    B, S, T = docs.shape
    H = p["enc_doc_whh"].shape[0]
    # Gate at the projection level: (z*emb)@W_ih + b == z*(emb@W_ih) + b, z in {0,1}.
    gx_tok = tables["enc_word"][docs] * z[:, :, None, None] + p["enc_sent_b"][0]
    gx_word = gx_tok.reshape(B * S, T, 4 * H).transpose(1, 0, 2)
    sent_h = lstm_last(gx_word, sent_lengths.reshape(B * S), p["enc_sent_whh"])
    feats = sent_h.reshape(B, S, H).transpose(1, 0, 2)
    gx_doc = dense(feats.reshape(S * B, H), p["enc_doc_wih"],
                   p["enc_doc_b"]).reshape(S, B, 4 * H)
    y = doc_encoder(gx_doc, doc_lengths, p["enc_doc_whh"], p["out_w"], p["out_b"])
    return y                                                          # [B, n_out]


@jax.jit
def rlmodel_forward(p, docs, doc_lengths, sent_lengths):
    # Hoisted word-level input projections: one [vocab, E] @ [E, 4H] matmul each
    # (bias is added after the gather so that z-gating stays exact).
    tables = {
        "gen_word": dense(p["gen_emb"], p["gen_sent_wih"]),           # [vocab, 4H]
        "enc_word": dense(p["enc_emb"], p["enc_sent_wih"]),           # [vocab, 4H]
    }
    z = generator_forward(p, docs, doc_lengths, sent_lengths, tables)
    y = encoder_forward(p, docs, doc_lengths, sent_lengths, z, tables)
    return y, z


# ---------------------------------------------------------------------------
if __name__ == "__main__":
    vocab_size = 50
    B, S, T = 2, 3, 8          # batch, max sentences per doc, max tokens per sentence
    emb_dim, hidden, n_out = 32, 32, 5
    pad_idx = 1

    key = jax.random.PRNGKey(0)
    k_doc, _ = jax.random.split(key)

    docs = jax.random.randint(k_doc, (B, S, T), 2, vocab_size, dtype=jnp.int32)
    doc_lengths = jnp.array([3, 2], dtype=jnp.int32)                  # sentences per doc
    sent_lengths = jnp.array([[8, 5, 3],
                              [6, 4, 0]], dtype=jnp.int32)            # tokens per sentence
    tok_pos = jnp.arange(T)[None, None, :]
    docs = jnp.where(tok_pos < sent_lengths[:, :, None], docs, pad_idx)

    params = init_params(jax.random.PRNGKey(42), vocab_size, emb_dim, hidden, n_out)

    preds, z = rlmodel_forward(params, docs, doc_lengths, sent_lengths)
    jax.block_until_ready((preds, z))

    assert preds.shape == (B, n_out) and preds.dtype == jnp.float32
    assert z.shape == (B, S)
    print("KERNEL_OK")
</pallas_src>

<mosaic_0001>
module attributes {stable_mosaic.version = 11 : i64} {
  func.func @_dense_kernel(%arg0: memref<56x32xf32, #tpu.memory_space<vmem>>, %arg1: memref<32x128xf32, #tpu.memory_space<vmem>>, %arg2: memref<1x128xf32, #tpu.memory_space<vmem>>, %arg3: memref<56x128xf32, #tpu.memory_space<vmem>>) attributes {dimension_semantics = [], scalar_prefetch = 0 : i64, scratch_operands = 0 : i64, tpu.core_type = #tpu.core_type<tc>} {
    %c0 = arith.constant 0 : index
    %c0_0 = arith.constant 0 : index
    %0 = vector.load %arg0[%c0, %c0_0] : memref<56x32xf32, #tpu.memory_space<vmem>>, vector<56x32xf32>
    %c0_1 = arith.constant 0 : index
    %c0_2 = arith.constant 0 : index
    %1 = vector.load %arg1[%c0_1, %c0_2] : memref<32x128xf32, #tpu.memory_space<vmem>>, vector<32x128xf32>
    %cst = arith.constant dense<0.000000e+00> : vector<56x128xf32>
    %2 = tpu.matmul %0, %1, %cst {dimension_numbers = #tpu.dot_dimension_numbers<[1], [0], [0], [1], [0, 0, 1, 1], [], []>} : vector<56x32xf32>, vector<32x128xf32>, vector<56x128xf32> -> vector<56x128xf32>
    %c0_3 = arith.constant 0 : index
    %c0_4 = arith.constant 0 : index
    %3 = vector.load %arg2[%c0_3, %c0_4] : memref<1x128xf32, #tpu.memory_space<vmem>>, vector<1x128xf32>
    %4 = vector.broadcast %3 : vector<1x128xf32> to vector<56x128xf32>
    %5 = arith.addf %2, %4 : vector<56x128xf32>
    %c0_5 = arith.constant 0 : index
    %c0_6 = arith.constant 0 : index
    %6 = vector.load %arg3[%c0_5, %c0_6] : memref<56x128xf32, #tpu.memory_space<vmem>>, vector<56x128xf32>
    tpu.vector_store %arg3[%c0_5, %c0_6], %5 {strides = array<i32>} : memref<56x128xf32, #tpu.memory_space<vmem>>, vector<56x128xf32>,
    return
  }
}

module attributes {stable_mosaic.version = 11 : i64} {
  func.func @_dense_kernel(%arg0: memref<8x32xf32, #tpu.memory_space<vmem>>, %arg1: memref<32x128xf32, #tpu.memory_space<vmem>>, %arg2: memref<1x128xf32, #tpu.memory_space<vmem>>, %arg3: memref<8x128xf32, #tpu.memory_space<vmem>>) attributes {dimension_semantics = [], scalar_prefetch = 0 : i64, scratch_operands = 0 : i64, tpu.core_type = #tpu.core_type<tc>} {
    %c0 = arith.constant 0 : index
    %c0_0 = arith.constant 0 : index
    %0 = vector.load %arg0[%c0, %c0_0] : memref<8x32xf32, #tpu.memory_space<vmem>>, vector<8x32xf32>
    %c0_1 = arith.constant 0 : index
    %c0_2 = arith.constant 0 : index
    %1 = vector.load %arg1[%c0_1, %c0_2] : memref<32x128xf32, #tpu.memory_space<vmem>>, vector<32x128xf32>
    %cst = arith.constant dense<0.000000e+00> : vector<8x128xf32>
    %2 = tpu.matmul %0, %1, %cst {dimension_numbers = #tpu.dot_dimension_numbers<[1], [0], [0], [1], [0, 0, 1, 1], [], []>} : vector<8x32xf32>, vector<32x128xf32>, vector<8x128xf32> -> vector<8x128xf32>
    %c0_3 = arith.constant 0 : index
    %c0_4 = arith.constant 0 : index
    %3 = vector.load %arg2[%c0_3, %c0_4] : memref<1x128xf32, #tpu.memory_space<vmem>>, vector<1x128xf32>
    %4 = vector.broadcast %3 : vector<1x128xf32> to vector<8x128xf32>
    %5 = arith.addf %2, %4 : vector<8x128xf32>
    %c0_5 = arith.constant 0 : index
    %c0_6 = arith.constant 0 : index
    %6 = vector.load %arg3[%c0_5, %c0_6] : memref<8x128xf32, #tpu.memory_space<vmem>>, vector<8x128xf32>
    tpu.vector_store %arg3[%c0_5, %c0_6], %5 {strides = array<i32>} : memref<8x128xf32, #tpu.memory_space<vmem>>, vector<8x128xf32>,
    return
  }
}

module attributes {stable_mosaic.version = 11 : i64} {
  func.func @_lstm_last_kernel(%arg0: i32, %arg1: memref<8x1xi32, #tpu.memory_space<vmem>>, %arg2: memref<8x8x128xf32, #tpu.memory_space<vmem>>, %arg3: memref<32x128xbf16, #tpu.memory_space<vmem>>, %arg4: memref<8x32xf32, #tpu.memory_space<vmem>>) attributes {dimension_semantics = [#tpu.dimension_semantics<parallel>], iteration_bounds = array<i64: 1>, scalar_prefetch = 0 : i64, scratch_operands = 0 : i64, tpu.core_type = #tpu.core_type<tc>, window_params = [{transform_indices = @transform_0, window_bounds = array<i64: 8, 1>}, {transform_indices = @transform_1, window_bounds = array<i64: 8, 8, 128>}, {pipeline_mode = #tpu.pipeline_mode<synchronous>, transform_indices = @transform_2, window_bounds = array<i64: 32, 128>}, {transform_indices = @transform_3, window_bounds = array<i64: 8, 32>}]} {
    %c0 = arith.constant 0 : index
    %c0_0 = arith.constant 0 : index
    %0 = vector.load %arg1[%c0, %c0_0] : memref<8x1xi32, #tpu.memory_space<vmem>>, vector<8x1xi32>
    %c0_1 = arith.constant 0 : index
    %c0_2 = arith.constant 0 : index
    %1 = vector.load %arg3[%c0_1, %c0_2] : memref<32x128xbf16, #tpu.memory_space<vmem>>, vector<32x128xbf16>
    %cst = arith.constant 0.000000e+00 : f32
    %2 = vector.broadcast %cst : f32 to vector<8x32xf32>
    %cst_3 = arith.constant 0.000000e+00 : f32
    %3 = vector.broadcast %cst_3 : f32 to vector<8x32xf32>
    %c0_i32 = arith.constant 0 : i32
    %c8_i32 = arith.constant 8 : i32
    %4 = arith.addi %c0_i32, %c8_i32 : i32
    %c1_i32 = arith.constant 1 : i32
    %5:2 = scf.for %arg5 = %c0_i32 to %4 step %c1_i32 iter_args(%arg6 = %2, %arg7 = %3) -> (vector<8x32xf32>, vector<8x32xf32>)  : i32 {
      %7 = arith.index_cast %arg5 : i32 to index
      %c0_7 = arith.constant 0 : index
      %c0_8 = arith.constant 0 : index
      %8 = vector.load %arg2[%7, %c0_7, %c0_8] : memref<8x8x128xf32, #tpu.memory_space<vmem>>, vector<1x8x128xf32>
      %9 = vector.shape_cast %8 : vector<1x8x128xf32> to vector<8x128xf32>
      %10 = arith.truncf %arg6 : vector<8x32xf32> to vector<8x32xbf16>
      %cst_9 = arith.constant dense<0.000000e+00> : vector<8x128xf32>
      %11 = tpu.matmul %10, %1, %cst_9 {dimension_numbers = #tpu.dot_dimension_numbers<[1], [0], [0], [1], [0, 0, 1, 1], [], []>} : vector<8x32xbf16>, vector<32x128xbf16>, vector<8x128xf32> -> vector<8x128xf32>
      %12 = arith.addf %9, %11 : vector<8x128xf32>
      %13 = vector.extract_strided_slice %12 {offsets = [0, 0], sizes = [8, 32], strides = [1, 1]} : vector<8x128xf32> to vector<8x32xf32>
      %14 = arith.negf %13 : vector<8x32xf32>
      %15 = math.exp %14 : vector<8x32xf32>
      %cst_10 = arith.constant 1.000000e+00 : f32
      %16 = vector.broadcast %cst_10 : f32 to vector<8x32xf32>
      %17 = arith.addf %16, %15 : vector<8x32xf32>
      %18 = arith.divf %16, %17 : vector<8x32xf32>
      %19 = vector.extract_strided_slice %12 {offsets = [0, 32], sizes = [8, 32], strides = [1, 1]} : vector<8x128xf32> to vector<8x32xf32>
      %20 = arith.negf %19 : vector<8x32xf32>
      %21 = math.exp %20 : vector<8x32xf32>
      %cst_11 = arith.constant 1.000000e+00 : f32
      %22 = vector.broadcast %cst_11 : f32 to vector<8x32xf32>
      %23 = arith.addf %22, %21 : vector<8x32xf32>
      %24 = arith.divf %22, %23 : vector<8x32xf32>
      %25 = vector.extract_strided_slice %12 {offsets = [0, 64], sizes = [8, 32], strides = [1, 1]} : vector<8x128xf32> to vector<8x32xf32>
      %26 = math.tanh %25 : vector<8x32xf32>
      %27 = vector.extract_strided_slice %12 {offsets = [0, 96], sizes = [8, 32], strides = [1, 1]} : vector<8x128xf32> to vector<8x32xf32>
      %28 = arith.negf %27 : vector<8x32xf32>
      %29 = math.exp %28 : vector<8x32xf32>
      %cst_12 = arith.constant 1.000000e+00 : f32
      %30 = vector.broadcast %cst_12 : f32 to vector<8x32xf32>
      %31 = arith.addf %30, %29 : vector<8x32xf32>
      %32 = arith.divf %30, %31 : vector<8x32xf32>
      %33 = arith.mulf %24, %arg7 : vector<8x32xf32>
      %34 = arith.mulf %18, %26 : vector<8x32xf32>
      %35 = arith.addf %33, %34 : vector<8x32xf32>
      %36 = math.tanh %35 : vector<8x32xf32>
      %37 = arith.mulf %32, %36 : vector<8x32xf32>
      %38 = vector.broadcast %arg5 : i32 to vector<8x1xi32>
      %39 = arith.cmpi sgt, %0, %38 : vector<8x1xi32>
      %40 = vector.shape_cast %39 : vector<8x1xi1> to vector<8x1xi1>
      %41 = vector.broadcast %40 : vector<8x1xi1> to vector<8x32xi1>
      %42 = arith.select %41, %37, %arg6 : vector<8x32xi1>, vector<8x32xf32>
      %43 = vector.shape_cast %39 : vector<8x1xi1> to vector<8x1xi1>
      %44 = vector.broadcast %43 : vector<8x1xi1> to vector<8x32xi1>
      %45 = arith.select %44, %35, %arg7 : vector<8x32xi1>, vector<8x32xf32>
      scf.yield %42, %45 : vector<8x32xf32>, vector<8x32xf32>
    }
    %c8_i32_4 = arith.constant 8 : i32
    %c0_5 = arith.constant 0 : index
    %c0_6 = arith.constant 0 : index
    %6 = vector.load %arg4[%c0_5, %c0_6] : memref<8x32xf32, #tpu.memory_space<vmem>>, vector<8x32xf32>
    tpu.vector_store %arg4[%c0_5, %c0_6], %5#0 {strides = array<i32>} : memref<8x32xf32, #tpu.memory_space<vmem>>, vector<8x32xf32>,
    return
  }
  func.func @transform_0(%arg0: i32) -> (i32, i32) {
    %c0_i32 = arith.constant 0 : i32
    %c0_i32_0 = arith.constant 0 : i32
    return %arg0, %c0_i32 : i32, i32
  }
  func.func @transform_1(%arg0: i32) -> (i32, i32, i32) {
    %c0_i32 = arith.constant 0 : i32
    %c0_i32_0 = arith.constant 0 : i32
    %c0_i32_1 = arith.constant 0 : i32
    return %c0_i32, %arg0, %c0_i32_0 : i32, i32, i32
  }
  func.func @transform_2(%arg0: i32) -> (i32, i32) {
    %c0_i32 = arith.constant 0 : i32
    %c0_i32_0 = arith.constant 0 : i32
    %c0_i32_1 = arith.constant 0 : i32
    return %c0_i32, %c0_i32_0 : i32, i32
  }
  func.func @transform_3(%arg0: i32) -> (i32, i32) {
    %c0_i32 = arith.constant 0 : i32
    %c0_i32_0 = arith.constant 0 : i32
    return %arg0, %c0_i32 : i32, i32
  }
}

module attributes {stable_mosaic.version = 11 : i64} {
  func.func @_doc_gen_kernel(%arg0: memref<8x1xi32, #tpu.memory_space<vmem>>, %arg1: memref<3x8x128xf32, #tpu.memory_space<vmem>>, %arg2: memref<32x128xbf16, #tpu.memory_space<vmem>>, %arg3: memref<1x32xf32, #tpu.memory_space<vmem>>, %arg4: memref<1x1xf32, #tpu.memory_space<vmem>>, %arg5: memref<3x8xf32, #tpu.memory_space<vmem>>, %arg6: memref<3x8x32xf32, #tpu.memory_space<vmem>>) attributes {dimension_semantics = [], scalar_prefetch = 0 : i64, scratch_operands = 1 : i64, tpu.core_type = #tpu.core_type<tc>} {
    %c0 = arith.constant 0 : index
    %c0_0 = arith.constant 0 : index
    %0 = vector.load %arg0[%c0, %c0_0] : memref<8x1xi32, #tpu.memory_space<vmem>>, vector<8x1xi32>
    %c0_1 = arith.constant 0 : index
    %c0_2 = arith.constant 0 : index
    %1 = vector.load %arg2[%c0_1, %c0_2] : memref<32x128xbf16, #tpu.memory_space<vmem>>, vector<32x128xbf16>
    %cst = arith.constant 0.000000e+00 : f32
    %2 = vector.broadcast %cst : f32 to vector<8x32xf32>
    %cst_3 = arith.constant 0.000000e+00 : f32
    %3 = vector.broadcast %cst_3 : f32 to vector<8x32xf32>
    %c0_i32 = arith.constant 0 : i32
    %c3_i32 = arith.constant 3 : i32
    %4 = arith.addi %c0_i32, %c3_i32 : i32
    %c1_i32 = arith.constant 1 : i32
    %5:2 = scf.for %arg7 = %c0_i32 to %4 step %c1_i32 iter_args(%arg8 = %2, %arg9 = %3) -> (vector<8x32xf32>, vector<8x32xf32>)  : i32 {
      %31 = arith.index_cast %arg7 : i32 to index
      %c0_17 = arith.constant 0 : index
      %c0_18 = arith.constant 0 : index
      %32 = vector.load %arg1[%31, %c0_17, %c0_18] : memref<3x8x128xf32, #tpu.memory_space<vmem>>, vector<1x8x128xf32>
      %33 = vector.shape_cast %32 : vector<1x8x128xf32> to vector<8x128xf32>
      %34 = arith.truncf %arg8 : vector<8x32xf32> to vector<8x32xbf16>
      %cst_19 = arith.constant dense<0.000000e+00> : vector<8x128xf32>
      %35 = tpu.matmul %34, %1, %cst_19 {dimension_numbers = #tpu.dot_dimension_numbers<[1], [0], [0], [1], [0, 0, 1, 1], [], []>} : vector<8x32xbf16>, vector<32x128xbf16>, vector<8x128xf32> -> vector<8x128xf32>
      %36 = arith.addf %33, %35 : vector<8x128xf32>
      %37 = vector.extract_strided_slice %36 {offsets = [0, 0], sizes = [8, 32], strides = [1, 1]} : vector<8x128xf32> to vector<8x32xf32>
      %38 = arith.negf %37 : vector<8x32xf32>
      %39 = math.exp %38 : vector<8x32xf32>
      %cst_20 = arith.constant 1.000000e+00 : f32
      %40 = vector.broadcast %cst_20 : f32 to vector<8x32xf32>
      %41 = arith.addf %40, %39 : vector<8x32xf32>
      %42 = arith.divf %40, %41 : vector<8x32xf32>
      %43 = vector.extract_strided_slice %36 {offsets = [0, 32], sizes = [8, 32], strides = [1, 1]} : vector<8x128xf32> to vector<8x32xf32>
      %44 = arith.negf %43 : vector<8x32xf32>
      %45 = math.exp %44 : vector<8x32xf32>
      %cst_21 = arith.constant 1.000000e+00 : f32
      %46 = vector.broadcast %cst_21 : f32 to vector<8x32xf32>
      %47 = arith.addf %46, %45 : vector<8x32xf32>
      %48 = arith.divf %46, %47 : vector<8x32xf32>
      %49 = vector.extract_strided_slice %36 {offsets = [0, 64], sizes = [8, 32], strides = [1, 1]} : vector<8x128xf32> to vector<8x32xf32>
      %50 = math.tanh %49 : vector<8x32xf32>
      %51 = vector.extract_strided_slice %36 {offsets = [0, 96], sizes = [8, 32], strides = [1, 1]} : vector<8x128xf32> to vector<8x32xf32>
      %52 = arith.negf %51 : vector<8x32xf32>
      %53 = math.exp %52 : vector<8x32xf32>
      %cst_22 = arith.constant 1.000000e+00 : f32
      %54 = vector.broadcast %cst_22 : f32 to vector<8x32xf32>
      %55 = arith.addf %54, %53 : vector<8x32xf32>
      %56 = arith.divf %54, %55 : vector<8x32xf32>
      %57 = arith.mulf %48, %arg9 : vector<8x32xf32>
      %58 = arith.mulf %42, %50 : vector<8x32xf32>
      %59 = arith.addf %57, %58 : vector<8x32xf32>
      %60 = math.tanh %59 : vector<8x32xf32>
      %61 = arith.mulf %56, %60 : vector<8x32xf32>
      %62 = vector.broadcast %arg7 : i32 to vector<8x1xi32>
      %63 = arith.cmpi sgt, %0, %62 : vector<8x1xi32>
      %64 = vector.shape_cast %63 : vector<8x1xi1> to vector<8x1xi1>
      %65 = vector.broadcast %64 : vector<8x1xi1> to vector<8x32xi1>
      %66 = arith.select %65, %61, %arg8 : vector<8x32xi1>, vector<8x32xf32>
      %67 = vector.shape_cast %63 : vector<8x1xi1> to vector<8x1xi1>
      %68 = vector.broadcast %67 : vector<8x1xi1> to vector<8x32xi1>
      %69 = arith.select %68, %59, %arg9 : vector<8x32xi1>, vector<8x32xf32>
      %70 = arith.index_cast %arg7 : i32 to index
      %c0_23 = arith.constant 0 : index
      %c0_24 = arith.constant 0 : index
      %71 = vector.load %arg6[%70, %c0_23, %c0_24] : memref<3x8x32xf32, #tpu.memory_space<vmem>>, vector<1x8x32xf32>
      %72 = vector.shape_cast %71 : vector<1x8x32xf32> to vector<8x32xf32>
      %73 = vector.shape_cast %66 : vector<8x32xf32> to vector<1x8x32xf32>
      tpu.vector_store %arg6[%70, %c0_23, %c0_24], %73 {strides = array<i32>} : memref<3x8x32xf32, #tpu.memory_space<vmem>>, vector<1x8x32xf32>,
      scf.yield %66, %69 : vector<8x32xf32>, vector<8x32xf32>
    }
    %c3_i32_4 = arith.constant 3 : i32
    %c0_5 = arith.constant 0 : index
    %c0_6 = arith.constant 0 : index
    %c0_7 = arith.constant 0 : index
    %6 = vector.load %arg6[%c0_5, %c0_6, %c0_7] : memref<3x8x32xf32, #tpu.memory_space<vmem>>, vector<3x8x32xf32>
    %c0_8 = arith.constant 0 : index
    %c0_9 = arith.constant 0 : index
    %7 = vector.load %arg3[%c0_8, %c0_9] : memref<1x32xf32, #tpu.memory_space<vmem>>, vector<1x32xf32>
    %8 = vector.shape_cast %7 : vector<1x32xf32> to vector<1x1x32xf32>
    %9 = vector.broadcast %8 : vector<1x1x32xf32> to vector<3x8x32xf32>
    %10 = arith.mulf %6, %9 : vector<3x8x32xf32>
    %cst_10 = arith.constant dense<0.000000e+00> : vector<3x8xf32>
    %11 = vector.multi_reduction <add>, %10, %cst_10 [2] : vector<3x8x32xf32> to vector<3x8xf32>
    %c0_11 = arith.constant 0 : index
    %c0_12 = arith.constant 0 : index
    %12 = vector.load %arg4[%c0_11, %c0_12] : memref<1x1xf32, #tpu.memory_space<vmem>>, vector<1x1xf32>
    %13 = vector.broadcast %12 : vector<1x1xf32> to vector<3x8xf32>
    %14 = arith.addf %11, %13 : vector<3x8xf32>
    %15 = arith.negf %14 : vector<3x8xf32>
    %16 = math.exp %15 : vector<3x8xf32>
    %cst_13 = arith.constant 1.000000e+00 : f32
    %17 = vector.broadcast %cst_13 : f32 to vector<3x8xf32>
    %18 = arith.addf %17, %16 : vector<3x8xf32>
    %19 = arith.divf %17, %18 : vector<3x8xf32>
    %20 = tpu.iota {dimensions = array<i32: 0>} : vector<3x8xi32>
    %21 = vector.shape_cast %0 : vector<8x1xi32> to vector<8xi32>
    %22 = vector.shape_cast %21 : vector<8xi32> to vector<1x8xi32>
    %23 = vector.broadcast %22 : vector<1x8xi32> to vector<3x8xi32>
    %24 = arith.cmpi slt, %20, %23 : vector<3x8xi32>
    %cst_14 = arith.constant 5.000000e-01 : f32
    %25 = vector.broadcast %cst_14 : f32 to vector<3x8xf32>
    %26 = arith.cmpf oge, %19, %25 : vector<3x8xf32>
    %27 = arith.andi %26, %24 : vector<3x8xi1>
    %28 = arith.extui %27 : vector<3x8xi1> to vector<3x8xi32>
    %29 = arith.sitofp %28 : vector<3x8xi32> to vector<3x8xf32>
    %c0_15 = arith.constant 0 : index
    %c0_16 = arith.constant 0 : index
    %30 = vector.load %arg5[%c0_15, %c0_16] : memref<3x8xf32, #tpu.memory_space<vmem>>, vector<3x8xf32>
    tpu.vector_store %arg5[%c0_15, %c0_16], %29 {strides = array<i32>} : memref<3x8xf32, #tpu.memory_space<vmem>>, vector<3x8xf32>,
    return
  }
}

module attributes {stable_mosaic.version = 11 : i64} {
  func.func @_doc_enc_kernel(%arg0: memref<8x1xi32, #tpu.memory_space<vmem>>, %arg1: memref<3x8x128xf32, #tpu.memory_space<vmem>>, %arg2: memref<32x128xbf16, #tpu.memory_space<vmem>>, %arg3: memref<32x5xf32, #tpu.memory_space<vmem>>, %arg4: memref<1x5xf32, #tpu.memory_space<vmem>>, %arg5: memref<8x5xf32, #tpu.memory_space<vmem>>) attributes {dimension_semantics = [], scalar_prefetch = 0 : i64, scratch_operands = 0 : i64, tpu.core_type = #tpu.core_type<tc>} {
    %c0 = arith.constant 0 : index
    %c0_0 = arith.constant 0 : index
    %0 = vector.load %arg0[%c0, %c0_0] : memref<8x1xi32, #tpu.memory_space<vmem>>, vector<8x1xi32>
    %c0_1 = arith.constant 0 : index
    %c0_2 = arith.constant 0 : index
    %1 = vector.load %arg2[%c0_1, %c0_2] : memref<32x128xbf16, #tpu.memory_space<vmem>>, vector<32x128xbf16>
    %cst = arith.constant 0.000000e+00 : f32
    %2 = vector.broadcast %cst : f32 to vector<8x32xf32>
    %cst_3 = arith.constant 0.000000e+00 : f32
    %3 = vector.broadcast %cst_3 : f32 to vector<8x32xf32>
    %c0_i32 = arith.constant 0 : i32
    %c3_i32 = arith.constant 3 : i32
    %4 = arith.addi %c0_i32, %c3_i32 : i32
    %c1_i32 = arith.constant 1 : i32
    %5:2 = scf.for %arg6 = %c0_i32 to %4 step %c1_i32 iter_args(%arg7 = %2, %arg8 = %3) -> (vector<8x32xf32>, vector<8x32xf32>)  : i32 {
      %17 = arith.index_cast %arg6 : i32 to index
      %c0_13 = arith.constant 0 : index
      %c0_14 = arith.constant 0 : index
      %18 = vector.load %arg1[%17, %c0_13, %c0_14] : memref<3x8x128xf32, #tpu.memory_space<vmem>>, vector<1x8x128xf32>
      %19 = vector.shape_cast %18 : vector<1x8x128xf32> to vector<8x128xf32>
      %20 = arith.truncf %arg7 : vector<8x32xf32> to vector<8x32xbf16>
      %cst_15 = arith.constant dense<0.000000e+00> : vector<8x128xf32>
      %21 = tpu.matmul %20, %1, %cst_15 {dimension_numbers = #tpu.dot_dimension_numbers<[1], [0], [0], [1], [0, 0, 1, 1], [], []>} : vector<8x32xbf16>, vector<32x128xbf16>, vector<8x128xf32> -> vector<8x128xf32>
      %22 = arith.addf %19, %21 : vector<8x128xf32>
      %23 = vector.extract_strided_slice %22 {offsets = [0, 0], sizes = [8, 32], strides = [1, 1]} : vector<8x128xf32> to vector<8x32xf32>
      %24 = arith.negf %23 : vector<8x32xf32>
      %25 = math.exp %24 : vector<8x32xf32>
      %cst_16 = arith.constant 1.000000e+00 : f32
      %26 = vector.broadcast %cst_16 : f32 to vector<8x32xf32>
      %27 = arith.addf %26, %25 : vector<8x32xf32>
      %28 = arith.divf %26, %27 : vector<8x32xf32>
      %29 = vector.extract_strided_slice %22 {offsets = [0, 32], sizes = [8, 32], strides = [1, 1]} : vector<8x128xf32> to vector<8x32xf32>
      %30 = arith.negf %29 : vector<8x32xf32>
      %31 = math.exp %30 : vector<8x32xf32>
      %cst_17 = arith.constant 1.000000e+00 : f32
      %32 = vector.broadcast %cst_17 : f32 to vector<8x32xf32>
      %33 = arith.addf %32, %31 : vector<8x32xf32>
      %34 = arith.divf %32, %33 : vector<8x32xf32>
      %35 = vector.extract_strided_slice %22 {offsets = [0, 64], sizes = [8, 32], strides = [1, 1]} : vector<8x128xf32> to vector<8x32xf32>
      %36 = math.tanh %35 : vector<8x32xf32>
      %37 = vector.extract_strided_slice %22 {offsets = [0, 96], sizes = [8, 32], strides = [1, 1]} : vector<8x128xf32> to vector<8x32xf32>
      %38 = arith.negf %37 : vector<8x32xf32>
      %39 = math.exp %38 : vector<8x32xf32>
      %cst_18 = arith.constant 1.000000e+00 : f32
      %40 = vector.broadcast %cst_18 : f32 to vector<8x32xf32>
      %41 = arith.addf %40, %39 : vector<8x32xf32>
      %42 = arith.divf %40, %41 : vector<8x32xf32>
      %43 = arith.mulf %34, %arg8 : vector<8x32xf32>
      %44 = arith.mulf %28, %36 : vector<8x32xf32>
      %45 = arith.addf %43, %44 : vector<8x32xf32>
      %46 = math.tanh %45 : vector<8x32xf32>
      %47 = arith.mulf %42, %46 : vector<8x32xf32>
      %48 = vector.broadcast %arg6 : i32 to vector<8x1xi32>
      %49 = arith.cmpi sgt, %0, %48 : vector<8x1xi32>
      %50 = vector.shape_cast %49 : vector<8x1xi1> to vector<8x1xi1>
      %51 = vector.broadcast %50 : vector<8x1xi1> to vector<8x32xi1>
      %52 = arith.select %51, %47, %arg7 : vector<8x32xi1>, vector<8x32xf32>
      %53 = vector.shape_cast %49 : vector<8x1xi1> to vector<8x1xi1>
      %54 = vector.broadcast %53 : vector<8x1xi1> to vector<8x32xi1>
      %55 = arith.select %54, %45, %arg8 : vector<8x32xi1>, vector<8x32xf32>
      scf.yield %52, %55 : vector<8x32xf32>, vector<8x32xf32>
    }
    %c3_i32_4 = arith.constant 3 : i32
    %c0_5 = arith.constant 0 : index
    %c0_6 = arith.constant 0 : index
    %6 = vector.load %arg3[%c0_5, %c0_6] : memref<32x5xf32, #tpu.memory_space<vmem>>, vector<32x5xf32>
    %cst_7 = arith.constant dense<0.000000e+00> : vector<8x5xf32>
    %7 = tpu.matmul %5#0, %6, %cst_7 {dimension_numbers = #tpu.dot_dimension_numbers<[1], [0], [0], [1], [0, 0, 1, 1], [], []>} : vector<8x32xf32>, vector<32x5xf32>, vector<8x5xf32> -> vector<8x5xf32>
    %c0_8 = arith.constant 0 : index
    %c0_9 = arith.constant 0 : index
    %8 = vector.load %arg4[%c0_8, %c0_9] : memref<1x5xf32, #tpu.memory_space<vmem>>, vector<1x5xf32>
    %9 = vector.broadcast %8 : vector<1x5xf32> to vector<8x5xf32>
    %10 = arith.addf %7, %9 : vector<8x5xf32>
    %11 = arith.negf %10 : vector<8x5xf32>
    %12 = math.exp %11 : vector<8x5xf32>
    %cst_10 = arith.constant 1.000000e+00 : f32
    %13 = vector.broadcast %cst_10 : f32 to vector<8x5xf32>
    %14 = arith.addf %13, %12 : vector<8x5xf32>
    %15 = arith.divf %13, %14 : vector<8x5xf32>
    %c0_11 = arith.constant 0 : index
    %c0_12 = arith.constant 0 : index
    %16 = vector.load %arg5[%c0_11, %c0_12] : memref<8x5xf32, #tpu.memory_space<vmem>>, vector<8x5xf32>
    tpu.vector_store %arg5[%c0_11, %c0_12], %15 {strides = array<i32>} : memref<8x5xf32, #tpu.memory_space<vmem>>, vector<8x5xf32>,
    return
  }
}

</mosaic_0001>

<llo_original>
// kernel: rlmodel_forward.8
$region0: #{rlmodel_forward.8}
  #allocation0 [shape = 'u32[]', space=smem, size = 0x4, offset = 0x4, fixed_abs, tag = 'smem constant byte address 0x4 - core index']
  #allocation1 [shape = 'u32[144,128]{1,0:T(1,128)}', space=vmem, size = 0x12000, scoped, tag = 'internal scratch']
  %s0 = inlined_call_operand.vmem [shape: f32[56,32], index: 0, kind: input, shape index: {}]
  %s1 = inlined_call_operand.vmem [shape: f32[32,128], index: 1, kind: input, shape index: {}]
  %s2 = inlined_call_operand.vmem [shape: f32[1,128], index: 2, kind: input, shape index: {}]
  %s3 = inlined_call_operand.vmem [shape: f32[56,128], index: 3, kind: output, shape index: {}]
  %s4 = sld [smem:[#allocation0]]
  $region22: #{rlmodel_forward.8} parent=0
    _
  %s6 = ssub.s32 1, %s4
  %s7 = scalar_select 0, %s6, %s4
  // Predicated region
  $region2: #{rlmodel_forward.8} parent=0 // pred_check
    _
  $region3: #{rlmodel_forward.8} parent=0 // pred_check_branch
    %9 = sbr.rel (0) target = $region5
  $region4: #{rlmodel_forward.8} parent=0 // pred_region
    _
  $region5: #{rlmodel_forward.8} parent=0 // pred_fallthru
    _
  // Predicated region
  $region6: #{rlmodel_forward.8} parent=0 // pred_check
    _
  $region7: #{rlmodel_forward.8} parent=0 // pred_check_branch
    %11 = sbr.rel (0) target = $region9
  $region8: #{rlmodel_forward.8} parent=0 // pred_region
    _
  $region9: #{rlmodel_forward.8} parent=0 // pred_fallthru
    _
  // Predicated region
  $region10: #{rlmodel_forward.8} parent=0 // pred_check
    _
  $region11: #{rlmodel_forward.8} parent=0 // pred_check_branch
    %13 = sbr.rel (0) target = $region13
  $region12: #{rlmodel_forward.8} parent=0 // pred_region
    _
  $region13: #{rlmodel_forward.8} parent=0 // pred_fallthru
    _
  %v14 = vld [vmem:[%s0] sm:$0xff]
  %v15 = vld [vmem:[%s0 + $0x8] sm:$0xff]
  %v16 = vld [vmem:[%s0 + $0x10] sm:$0xff]
  %v17 = vld [vmem:[%s0 + $0x18] sm:$0xff]
  %v18 = vld [vmem:[%s0 + $0x20] sm:$0xff]
  %v19 = vld [vmem:[%s0 + $0x28] sm:$0xff]
  %v20 = vld [vmem:[%s0 + $0x30] sm:$0xff]
  %v21 = vld [vmem:[%s1] sm:$0xff]
  %v22 = vld [vmem:[%s1 + $0x8] sm:$0xff]
  %v23 = vld [vmem:[%s1 + $0x10] sm:$0xff]
  %v24 = vld [vmem:[%s1 + $0x18] sm:$0xff]
  %v25 = vld [vmem:[%s2] sm:$0x1]
  %v27 = vlaneseq
  %v28 = vshrl.u32 %v27, 7
  %v29 = vsub.s32 0, %v28
  %v30 = vrot.slane %v25, %v29
  %vm32 = vcmask 261120
  %v34 = vsel %vm32, %v14, 0
  %v37 = vsel %vm32, %v15, 0
  %v40 = vsel %vm32, %v16, 0
  %v43 = vsel %vm32, %v17, 0
  %v46 = vsel %vm32, %v18, 0
  %v49 = vsel %vm32, %v19, 0
  %v52 = vsel %vm32, %v20, 0
  %54 = vmatprep.subr.mxu0 0.0
  %55 = vmatpush1.msra.mxu0 0.0
  %56 = vmatprep.subr.mxu0 0.0
  %57 = vmatpush1.msra.mxu0 0.0
  %58 = vmatprep.subr.mxu0 0.0
  %59 = vmatpush1.msra.mxu0 0.0
  %60 = vmatprep.subr.mxu0 0.0
  %61 = vmatpush1.msra.mxu0 0.0
  %62 = vmatprep.subr.mxu0 0.0
  %63 = vmatpush1.msra.mxu0 0.0
  %64 = vmatprep.subr.mxu0 0.0
  %65 = vmatpush1.msra.mxu0 0.0
  %66 = vmatprep.subr.mxu0 0.0
  %67 = vmatpush1.msra.mxu0 0.0
  %68 = vmatprep.subr.mxu0 0.0
  %69 = vmatpush1.msra.mxu0 0.0
  %70 = vmatprep.subr.mxu0 0.0
  %71 = vmatpush1.msra.mxu0 0.0
  %72 = vmatprep.subr.mxu0 0.0
  %73 = vmatpush1.msra.mxu0 0.0
  %74 = vmatprep.subr.mxu0 0.0
  %75 = vmatpush1.msra.mxu0 0.0
  %76 = vmatprep.subr.mxu0 0.0
  %77 = vmatpush1.msra.mxu0 0.0
  %78 = vmatprep.subr.mxu0 0.0
  %79 = vmatpush1.msra.mxu0 %v24
  %80 = vmatprep.subr.mxu0 0.0
  %81 = vmatpush1.msra.mxu0 %v23
  %82 = vmatprep.subr.mxu0 0.0
  %83 = vmatpush1.msra.mxu0 %v22
  %84 = vmatprep.subr.mxu0 0.0
  %85 = vmatpush1.msra.mxu0 %v21
  %86 = vmatprep.subr.mxu0 0.0
  %87 = vmatpush2.msra.mxu0 0.0
  %88 = vmatprep.subr.mxu0 0.0
  %89 = vmatpush2.msra.mxu0 0.0
  %90 = vmatprep.subr.mxu0 0.0
  %91 = vmatpush2.msra.mxu0 0.0
  %92 = vmatprep.subr.mxu0 0.0
  %93 = vmatpush2.msra.mxu0 0.0
  %94 = vmatprep.subr.mxu0 0.0
  %95 = vmatpush2.msra.mxu0 0.0
  %96 = vmatprep.subr.mxu0 0.0
  %97 = vmatpush2.msra.mxu0 0.0
  %98 = vmatprep.subr.mxu0 0.0
  %99 = vmatpush2.msra.mxu0 0.0
  %100 = vmatprep.subr.mxu0 0.0
  %101 = vmatpush2.msra.mxu0 0.0
  %102 = vmatprep.subr.mxu0 0.0
  %103 = vmatpush2.msra.mxu0 0.0
  %104 = vmatprep.subr.mxu0 0.0
  %105 = vmatpush2.msra.mxu0 0.0
  %106 = vmatprep.subr.mxu0 0.0
  %107 = vmatpush2.msra.mxu0 0.0
  %108 = vmatprep.subr.mxu0 0.0
  %109 = vmatpush2.msra.mxu0 0.0
  %110 = vmatprep.subr.mxu0 0.0
  %111 = vmatpush2.msra.mxu0 0.0
  %112 = vmatprep.subr.mxu0 0.0
  %113 = vmatpush2.msra.mxu0 0.0
  %114 = vmatprep.subr.mxu0 0.0
  %115 = vmatpush2.msra.mxu0 0.0
  %116 = vmatprep.subr.mxu0 0.0
  %117 = vmatpush2.msra.mxu0 0.0
  %118 = vmatprep.mubr.f32.mxu0 0.0
  %119 = vmatmul.mubr.f32.gmra.mxu0 %v34
  %v120 = vpop.f32.mrf.mxu0
  %v121 = vadd.f32 %v30, %v120
  %v122 = vpop.f32.mrf.mxu0
  %123 = vmatprep.mubr.f32.mxu0 0.0
  %124 = vmatmul.mubr.f32.gmra.mxu0 %v37
  %v125 = vpop.f32.mrf.mxu0
  %v126 = vadd.f32 %v30, %v125
  %v127 = vpop.f32.mrf.mxu0
  %128 = vmatprep.mubr.f32.mxu0 0.0
  %129 = vmatmul.mubr.f32.gmra.mxu0 %v40
  %v130 = vpop.f32.mrf.mxu0
  %v131 = vadd.f32 %v30, %v130
  %v132 = vpop.f32.mrf.mxu0
  %133 = vmatprep.mubr.f32.mxu0 0.0
  %134 = vmatmul.mubr.f32.gmra.mxu0 %v43
  %v135 = vpop.f32.mrf.mxu0
  %v136 = vadd.f32 %v30, %v135
  %v137 = vpop.f32.mrf.mxu0
  %138 = vmatprep.mubr.f32.mxu0 0.0
  %139 = vmatmul.mubr.f32.gmra.mxu0 %v46
  %v140 = vpop.f32.mrf.mxu0
  %v141 = vadd.f32 %v30, %v140
  %v142 = vpop.f32.mrf.mxu0
  %143 = vmatprep.mubr.f32.mxu0 0.0
  %144 = vmatmul.mubr.f32.gmra.mxu0 %v49
  %v145 = vpop.f32.mrf.mxu0
  %v146 = vadd.f32 %v30, %v145
  %v147 = vpop.f32.mrf.mxu0
  %148 = vmatprep.mubr.f32.mxu0 0.0
  %149 = vmatmul.mubr.f32.gmra.mxu0 %v52
  %v150 = vpop.f32.mrf.mxu0
  %v151 = vadd.f32 %v30, %v150
  %v152 = vpop.f32.mrf.mxu0
  %153 = vdwg.mxu0
  %154 = vst [vmem:[%s3] sm:$0xff] %v121
  %155 = vst [vmem:[%s3 + $0x8] sm:$0xff] %v126
  %156 = vst [vmem:[%s3 + $0x10] sm:$0xff] %v131
  %157 = vst [vmem:[%s3 + $0x18] sm:$0xff] %v136
  %158 = vst [vmem:[%s3 + $0x20] sm:$0xff] %v141
  %159 = vst [vmem:[%s3 + $0x28] sm:$0xff] %v146
  %160 = vst [vmem:[%s3 + $0x30] sm:$0xff] %v151
  // Predicated region
  $region14: #{rlmodel_forward.8} parent=0 // pred_check
    _
  $region15: #{rlmodel_forward.8} parent=0 // pred_check_branch
    %162 = sbr.rel (0) target = $region17
  $region16: #{rlmodel_forward.8} parent=0 // pred_region
    _
  $region17: #{rlmodel_forward.8} parent=0 // pred_fallthru
    _
  // Predicated region
  $region18: #{rlmodel_forward.8} parent=0 // pred_check
    _
  $region19: #{rlmodel_forward.8} parent=0 // pred_check_branch
    %164 = sbr.rel (0) target = $region21
  $region20: #{rlmodel_forward.8} parent=0 // pred_region
    _
  $region21: #{rlmodel_forward.8} parent=0 // pred_fallthru
    _

// kernel: rlmodel_forward.11
$region0: #{rlmodel_forward.11}
  #allocation0 [shape = 'u32[]', space=smem, size = 0x4, offset = 0x4, fixed_abs, tag = 'smem constant byte address 0x4 - core index']
  #allocation1 [shape = 'u32[144,128]{1,0:T(1,128)}', space=vmem, size = 0x12000, scoped, tag = 'internal scratch']
  %s0 = inlined_call_operand.vmem [shape: f32[8,32], index: 0, kind: input, shape index: {}]
  %s1 = inlined_call_operand.vmem [shape: f32[32,128], index: 1, kind: input, shape index: {}]
  %s2 = inlined_call_operand.vmem [shape: f32[1,128], index: 2, kind: input, shape index: {}]
  %s3 = inlined_call_operand.vmem [shape: f32[8,128], index: 3, kind: output, shape index: {}]
  %s4 = sld [smem:[#allocation0]]
  $region22: #{rlmodel_forward.11} parent=0
    _
  %s6 = ssub.s32 1, %s4
  %s7 = scalar_select 0, %s6, %s4
  // Predicated region
  $region2: #{rlmodel_forward.11} parent=0 // pred_check
    _
  $region3: #{rlmodel_forward.11} parent=0 // pred_check_branch
    %9 = sbr.rel (0) target = $region5
  $region4: #{rlmodel_forward.11} parent=0 // pred_region
    _
  $region5: #{rlmodel_forward.11} parent=0 // pred_fallthru
    _
  // Predicated region
  $region6: #{rlmodel_forward.11} parent=0 // pred_check
    _
  $region7: #{rlmodel_forward.11} parent=0 // pred_check_branch
    %11 = sbr.rel (0) target = $region9
  $region8: #{rlmodel_forward.11} parent=0 // pred_region
    _
  $region9: #{rlmodel_forward.11} parent=0 // pred_fallthru
    _
  // Predicated region
  $region10: #{rlmodel_forward.11} parent=0 // pred_check
    _
  $region11: #{rlmodel_forward.11} parent=0 // pred_check_branch
    %13 = sbr.rel (0) target = $region13
  $region12: #{rlmodel_forward.11} parent=0 // pred_region
    _
  $region13: #{rlmodel_forward.11} parent=0 // pred_fallthru
    _
  %v14 = vld [vmem:[%s0] sm:$0xff]
  %v15 = vld [vmem:[%s1] sm:$0xff]
  %v16 = vld [vmem:[%s1 + $0x8] sm:$0xff]
  %v17 = vld [vmem:[%s1 + $0x10] sm:$0xff]
  %v18 = vld [vmem:[%s1 + $0x18] sm:$0xff]
  %v19 = vld [vmem:[%s2] sm:$0x1]
  %v21 = vlaneseq
  %v22 = vshrl.u32 %v21, 7
  %v23 = vsub.s32 0, %v22
  %v24 = vrot.slane %v19, %v23
  %vm26 = vcmask 261120
  %v28 = vsel %vm26, %v14, 0
  %30 = vmatprep.subr.mxu0 0.0
  %31 = vmatpush1.msra.mxu0 0.0
  %32 = vmatprep.subr.mxu0 0.0
  %33 = vmatpush1.msra.mxu0 0.0
  %34 = vmatprep.subr.mxu0 0.0
  %35 = vmatpush1.msra.mxu0 0.0
  %36 = vmatprep.subr.mxu0 0.0
  %37 = vmatpush1.msra.mxu0 0.0
  %38 = vmatprep.subr.mxu0 0.0
  %39 = vmatpush1.msra.mxu0 0.0
  %40 = vmatprep.subr.mxu0 0.0
  %41 = vmatpush1.msra.mxu0 0.0
  %42 = vmatprep.subr.mxu0 0.0
  %43 = vmatpush1.msra.mxu0 0.0
  %44 = vmatprep.subr.mxu0 0.0
  %45 = vmatpush1.msra.mxu0 0.0
  %46 = vmatprep.subr.mxu0 0.0
  %47 = vmatpush1.msra.mxu0 0.0
  %48 = vmatprep.subr.mxu0 0.0
  %49 = vmatpush1.msra.mxu0 0.0
  %50 = vmatprep.subr.mxu0 0.0
  %51 = vmatpush1.msra.mxu0 0.0
  %52 = vmatprep.subr.mxu0 0.0
  %53 = vmatpush1.msra.mxu0 0.0
  %54 = vmatprep.subr.mxu0 0.0
  %55 = vmatpush1.msra.mxu0 %v18
  %56 = vmatprep.subr.mxu0 0.0
  %57 = vmatpush1.msra.mxu0 %v17
  %58 = vmatprep.subr.mxu0 0.0
  %59 = vmatpush1.msra.mxu0 %v16
  %60 = vmatprep.subr.mxu0 0.0
  %61 = vmatpush1.msra.mxu0 %v15
  %62 = vmatprep.subr.mxu0 0.0
  %63 = vmatpush2.msra.mxu0 0.0
  %64 = vmatprep.subr.mxu0 0.0
  %65 = vmatpush2.msra.mxu0 0.0
  %66 = vmatprep.subr.mxu0 0.0
  %67 = vmatpush2.msra.mxu0 0.0
  %68 = vmatprep.subr.mxu0 0.0
  %69 = vmatpush2.msra.mxu0 0.0
  %70 = vmatprep.subr.mxu0 0.0
  %71 = vmatpush2.msra.mxu0 0.0
  %72 = vmatprep.subr.mxu0 0.0
  %73 = vmatpush2.msra.mxu0 0.0
  %74 = vmatprep.subr.mxu0 0.0
  %75 = vmatpush2.msra.mxu0 0.0
  %76 = vmatprep.subr.mxu0 0.0
  %77 = vmatpush2.msra.mxu0 0.0
  %78 = vmatprep.subr.mxu0 0.0
  %79 = vmatpush2.msra.mxu0 0.0
  %80 = vmatprep.subr.mxu0 0.0
  %81 = vmatpush2.msra.mxu0 0.0
  %82 = vmatprep.subr.mxu0 0.0
  %83 = vmatpush2.msra.mxu0 0.0
  %84 = vmatprep.subr.mxu0 0.0
  %85 = vmatpush2.msra.mxu0 0.0
  %86 = vmatprep.subr.mxu0 0.0
  %87 = vmatpush2.msra.mxu0 0.0
  %88 = vmatprep.subr.mxu0 0.0
  %89 = vmatpush2.msra.mxu0 0.0
  %90 = vmatprep.subr.mxu0 0.0
  %91 = vmatpush2.msra.mxu0 0.0
  %92 = vmatprep.subr.mxu0 0.0
  %93 = vmatpush2.msra.mxu0 0.0
  %94 = vmatprep.mubr.f32.mxu0 0.0
  %95 = vmatmul.mubr.f32.gmra.mxu0 %v28
  %v96 = vpop.f32.mrf.mxu0
  %v97 = vadd.f32 %v24, %v96
  %v98 = vpop.f32.mrf.mxu0
  %99 = vdwg.mxu0
  %100 = vst [vmem:[%s3] sm:$0xff] %v97
  // Predicated region
  $region14: #{rlmodel_forward.11} parent=0 // pred_check
    _
  $region15: #{rlmodel_forward.11} parent=0 // pred_check_branch
    %102 = sbr.rel (0) target = $region17
  $region16: #{rlmodel_forward.11} parent=0 // pred_region
    _
  $region17: #{rlmodel_forward.11} parent=0 // pred_fallthru
    _
  // Predicated region
  $region18: #{rlmodel_forward.11} parent=0 // pred_check
    _
  $region19: #{rlmodel_forward.11} parent=0 // pred_check_branch
    %104 = sbr.rel (0) target = $region21
  $region20: #{rlmodel_forward.11} parent=0 // pred_region
    _
  $region21: #{rlmodel_forward.11} parent=0 // pred_fallthru
    _

// kernel: rlmodel_forward.10
$region0: #{rlmodel_forward.10}
  #allocation0 [shape = 'u32[]', space=smem, size = 0x4, offset = 0x4, fixed_abs, tag = 'smem constant byte address 0x4 - core index']
  #allocation1 [shape = 'u32[144,128]{1,0:T(1,128)}', space=vmem, size = 0x12000, scoped, tag = 'internal scratch']
  %s0 = inlined_call_operand.vmem [shape: s32[8,1], index: 0, kind: input, shape index: {}]
  %s1 = inlined_call_operand.vmem [shape: f32[8,8,128], index: 1, kind: input, shape index: {}]
  %s2 = inlined_call_operand.vmem [shape: bf16[32,128], index: 2, kind: input, shape index: {}]
  %s3 = inlined_call_operand.vmem [shape: f32[8,32], index: 3, kind: output, shape index: {}]
  %s4 = sld [smem:[#allocation0]]
  $region29: #{rlmodel_forward.10} parent=0
    _
  %s6 = ssub.s32 1, %s4
  %s7 = scalar_select 0, %s6, %s4
  // Predicated region
  $region2: #{rlmodel_forward.10} parent=0 // pred_check
    _
  $region3: #{rlmodel_forward.10} parent=0 // pred_check_branch
    %9 = sbr.rel (0) target = $region5
  $region4: #{rlmodel_forward.10} parent=0 // pred_region
    _
  $region5: #{rlmodel_forward.10} parent=0 // pred_fallthru
    _
  // Predicated region
  $region6: #{rlmodel_forward.10} parent=0 // pred_check
    _
  $region7: #{rlmodel_forward.10} parent=0 // pred_check_branch
    %11 = sbr.rel (0) target = $region9
  $region8: #{rlmodel_forward.10} parent=0 // pred_region
    _
  $region9: #{rlmodel_forward.10} parent=0 // pred_fallthru
    _
  // Predicated region
  $region10: #{rlmodel_forward.10} parent=0 // pred_check
    _
  $region11: #{rlmodel_forward.10} parent=0 // pred_check_branch
    %13 = sbr.rel (0) target = $region13
  $region12: #{rlmodel_forward.10} parent=0 // pred_region
    _
  $region13: #{rlmodel_forward.10} parent=0 // pred_fallthru
    _
  %v15 = vld [vmem:[%s0] sm:$0xff]
  %v16 = vld [vmem:[%s2] sm:$0xf]
  %v17 = vld [vmem:[%s2 + $0x4] sm:$0xf]
  %v18 = vld [vmem:[%s2 + $0x8] sm:$0xf]
  %v19 = vld [vmem:[%s2 + $0xc] sm:$0xf]
  loop: start=0, step=1, limit=8
  $region14: #{rlmodel_forward.10} parent=0 // loop_pre_header
    _
  $region15: #{rlmodel_forward.10} parent=0 // loop_header
    %s21 = sphi 0, %s25
    %p22 = scmp.ge.s32.totalorder %s21, 8
    %v26 = vphi 0.0, %v123
    %v27 = vphi 0.0, %v124
  $region16: #{rlmodel_forward.10} parent=0 // loop_header_branch
    %24 = sbr.rel (%p22) target = $region20
  $region17: #{rlmodel_forward.10} parent=0 // loop_body
    %s28 = smul.u32 %s21, 8
    %s29 = scalar_lea.vmem %s1, %s28
    %v30 = vld [vmem:[%s29] sm:$0xff]
    %v31 = vpack.c.bf16 %v26, %v26
    %33 = vrot.lane.b32.xlu0 %v31, 32
    %v34 = vpop.permute.xlu0 %33
    %v39 = vunpack.c.l.b16 %v16
    %v40 = vunpack.c.l.b16 %v17
    %v41 = vunpack.c.l.b16 %v18
    %v42 = vunpack.c.l.b16 %v19
    %v43 = vpack.c.b16 %v40, %v39
    %v44 = vpack.c.b16 %v42, %v41
    %vm47 = vcmask 261120
    %v49 = vsel %vm47, %v34, 0
    %51 = vmatprep.subr.bf16.mxu0 0
    %52 = vmatpush1.bf16.msra.mxu0 0
    %53 = vmatprep.subr.bf16.mxu0 0
    %54 = vmatpush1.bf16.msra.mxu0 0
    %55 = vmatprep.subr.bf16.mxu0 0
    %56 = vmatpush1.bf16.msra.mxu0 0
    %57 = vmatprep.subr.bf16.mxu0 0
    %58 = vmatpush1.bf16.msra.mxu0 0
    %59 = vmatprep.subr.bf16.mxu0 0
    %60 = vmatpush1.bf16.msra.mxu0 0
    %61 = vmatprep.subr.bf16.mxu0 0
    %62 = vmatpush1.bf16.msra.mxu0 0
    %63 = vmatprep.subr.bf16.mxu0 0
    %64 = vmatpush1.bf16.msra.mxu0 %v44
    %65 = vmatprep.subr.bf16.mxu0 0
    %66 = vmatpush1.bf16.msra.mxu0 %v43
    %67 = vmatprep.subr.bf16.mxu0 0
    %68 = vmatpush2.bf16.msra.mxu0 0
    %69 = vmatprep.subr.bf16.mxu0 0
    %70 = vmatpush2.bf16.msra.mxu0 0
    %71 = vmatprep.subr.bf16.mxu0 0
    %72 = vmatpush2.bf16.msra.mxu0 0
    %73 = vmatprep.subr.bf16.mxu0 0
    %74 = vmatpush2.bf16.msra.mxu0 0
    %75 = vmatprep.subr.bf16.mxu0 0
    %76 = vmatpush2.bf16.msra.mxu0 0
    %77 = vmatprep.subr.bf16.mxu0 0
    %78 = vmatpush2.bf16.msra.mxu0 0
    %79 = vmatprep.subr.bf16.mxu0 0
    %80 = vmatpush2.bf16.msra.mxu0 0
    %81 = vmatprep.subr.bf16.mxu0 0
    %82 = vmatpush2.bf16.msra.mxu0 0
    %83 = vmatprep.mubr.bf16.mxu0 0
    %84 = vmatmul.mubr.bf16.gmra.mxu0 %v49
    %v85 = vpop.f32.mrf.mxu0
    %v86 = vadd.f32 0.0, %v85
    %v87 = vpop.f32.mrf.mxu0
    %v88 = vpop.f32.mrf.mxu0
    %v89 = vpop.f32.mrf.mxu0
    %90 = vdwg.mxu0
    %v91 = vadd.f32 %v30, %v86
    %v92 = vxor.u32 %v91, 2147483648
    %v93 = vmul.f32 %v92, 1.442695
    %v94 = vpow.pop %v93
    %v95 = vadd.f32 %v94, 1.0
    %v96 = vrcp.pop %v95
    %v97 = vmul.f32 1.0, %v96
    %v98 = vtanh.pop %v91
    %v99 = vmul.f32 %v97, %v27
    %101 = vrot.lane.b32.xlu0 %v98, 64
    %v102 = vpop.permute.xlu0 %101
    %v104 = vmul.f32 %v97, %v102
    %106 = vrot.lane.b32.xlu0 %v104, 32
    %v107 = vpop.permute.xlu0 %106
    %v109 = vadd.f32 %v99, %v107
    %v110 = vtanh.pop %v109
    %112 = vrot.lane.b32.xlu0 %v110, 64
    %v113 = vpop.permute.xlu0 %112
    %v115 = vmul.f32 %v97, %v113
    %v116 = vstv %s21
    %vm117 = vcmp.gt.s32.totalorder %v15, %v116
    %v118 = vsel %vm117, 1, 0
    %119 = vset.pattern.permute.xlu0 0
    %120 = vperm.xlu0 %119, %v118
    %v121 = vpop.permute.xlu0 %120
    %vm122 = vcmp.eq.s32.totalorder %v121, 1
    %v123 = vsel %vm122, %v115, %v26
    %v124 = vsel %vm122, %v109, %v27
  $region18: #{rlmodel_forward.10} parent=0 // loop_footer
    %s25 = sadd.s32 1, %s21
  $region19: #{rlmodel_forward.10} parent=0 // loop_footer_branch
    %20 = sbr.rel target = $region15
  $region20: #{rlmodel_forward.10} parent=0 // loop_exit
    _
  %126 = vrot.lane.b32.xlu0 %v26, 32
  %v127 = vpop.permute.xlu0 %126
  %vm129 = vcmask 261120
  %130 = vst.msk [vmem:[%s3] sm:$0xff] %vm129, %v127
  // Predicated region
  $region21: #{rlmodel_forward.10} parent=0 // pred_check
    _
  $region22: #{rlmodel_forward.10} parent=0 // pred_check_branch
    %132 = sbr.rel (0) target = $region24
  $region23: #{rlmodel_forward.10} parent=0 // pred_region
    _
  $region24: #{rlmodel_forward.10} parent=0 // pred_fallthru
    _
  // Predicated region
  $region25: #{rlmodel_forward.10} parent=0 // pred_check
    _
  $region26: #{rlmodel_forward.10} parent=0 // pred_check_branch
    %134 = sbr.rel (0) target = $region28
  $region27: #{rlmodel_forward.10} parent=0 // pred_region
    _
  $region28: #{rlmodel_forward.10} parent=0 // pred_fallthru
    _

// kernel: rlmodel_forward.12
$region0: #{rlmodel_forward.12}
  #allocation0 [shape = 'u32[]', space=smem, size = 0x4, offset = 0x4, fixed_abs, tag = 'smem constant byte address 0x4 - core index']
  #allocation1 [shape = 'u32[144,128]{1,0:T(1,128)}', space=vmem, size = 0x12000, scoped, tag = 'internal scratch']
  #allocation2 [shape = 'f32[3,8,32]{2,1,0:T(8,128)}', space=vmem, size = 0x3000, scoped, tag = 'scratch operand']
  #allocation3 [shape = 'f32[1,1]{1,0:T(1,128)S(1)}', space=vmem, size = 0x200, scoped, tag = 'scoped memory for rlmodel_forward.12']
  %s0 = inlined_call_operand.vmem [shape: s32[8,1], index: 0, kind: input, shape index: {}]
  %s1 = inlined_call_operand.vmem [shape: f32[3,8,128], index: 1, kind: input, shape index: {}]
  %s2 = inlined_call_operand.vmem [shape: bf16[32,128], index: 2, kind: input, shape index: {}]
  %s3 = inlined_call_operand.vmem [shape: f32[1,32], index: 3, kind: input, shape index: {}]
  %s4 = inlined_call_operand.<no memory space> [shape: f32[1,1], index: 4, kind: input, shape index: {}]
  %s5 = inlined_call_operand.vmem [shape: f32[3,8], index: 5, kind: output, shape index: {}]
  %s6 = sld [smem:[#allocation0]]
  $region37: #{rlmodel_forward.12} parent=0
    _
  %s8 = ssub.s32 1, %s6
  %s9 = scalar_select 0, %s8, %s6
  %v10 = vstv %s4
  %11 = vst [vmem:[#allocation3] sm:$0x1] %v10
  // Predicated region
  $region2: #{rlmodel_forward.12} parent=0 // pred_check
    _
  $region3: #{rlmodel_forward.12} parent=0 // pred_check_branch
    %13 = sbr.rel (0) target = $region5
  $region4: #{rlmodel_forward.12} parent=0 // pred_region
    _
  $region5: #{rlmodel_forward.12} parent=0 // pred_fallthru
    _
  // Predicated region
  $region6: #{rlmodel_forward.12} parent=0 // pred_check
    _
  $region7: #{rlmodel_forward.12} parent=0 // pred_check_branch
    %15 = sbr.rel (0) target = $region9
  $region8: #{rlmodel_forward.12} parent=0 // pred_region
    _
  $region9: #{rlmodel_forward.12} parent=0 // pred_fallthru
    _
  // Predicated region
  $region10: #{rlmodel_forward.12} parent=0 // pred_check
    _
  $region11: #{rlmodel_forward.12} parent=0 // pred_check_branch
    %17 = sbr.rel (0) target = $region13
  $region12: #{rlmodel_forward.12} parent=0 // pred_region
    _
  $region13: #{rlmodel_forward.12} parent=0 // pred_fallthru
    _
  // Predicated region
  $region14: #{rlmodel_forward.12} parent=0 // pred_check
    _
  $region15: #{rlmodel_forward.12} parent=0 // pred_check_branch
    %19 = sbr.rel (0) target = $region17
  $region16: #{rlmodel_forward.12} parent=0 // pred_region
    _
  $region17: #{rlmodel_forward.12} parent=0 // pred_fallthru
    _
  // Predicated region
  $region18: #{rlmodel_forward.12} parent=0 // pred_check
    _
  $region19: #{rlmodel_forward.12} parent=0 // pred_check_branch
    %21 = sbr.rel (0) target = $region21
  $region20: #{rlmodel_forward.12} parent=0 // pred_region
    _
  $region21: #{rlmodel_forward.12} parent=0 // pred_fallthru
    _
  %v23 = vld [vmem:[%s0] sm:$0xff]
  %v24 = vld [vmem:[%s2] sm:$0xf]
  %v25 = vld [vmem:[%s2 + $0x4] sm:$0xf]
  %v26 = vld [vmem:[%s2 + $0x8] sm:$0xf]
  %v27 = vld [vmem:[%s2 + $0xc] sm:$0xf]
  loop: start=0, step=1, limit=3
  $region22: #{rlmodel_forward.12} parent=0 // loop_pre_header
    _
  $region23: #{rlmodel_forward.12} parent=0 // loop_header
    %s29 = sphi 0, %s33
    %p30 = scmp.ge.s32.totalorder %s29, 3
    %v34 = vphi 0.0, %v131
    %v35 = vphi 0.0, %v132
  $region24: #{rlmodel_forward.12} parent=0 // loop_header_branch
    %32 = sbr.rel (%p30) target = $region28
  $region25: #{rlmodel_forward.12} parent=0 // loop_body
    %s36 = smul.u32 %s29, 8
    %s37 = scalar_lea.vmem %s1, %s36
    %v38 = vld [vmem:[%s37] sm:$0xff]
    %v39 = vpack.c.bf16 %v34, %v34
    %41 = vrot.lane.b32.xlu0 %v39, 32
    %v42 = vpop.permute.xlu0 %41
    %v47 = vunpack.c.l.b16 %v24
    %v48 = vunpack.c.l.b16 %v25
    %v49 = vunpack.c.l.b16 %v26
    %v50 = vunpack.c.l.b16 %v27
    %v51 = vpack.c.b16 %v48, %v47
    %v52 = vpack.c.b16 %v50, %v49
    %vm55 = vcmask 261120
    %v57 = vsel %vm55, %v42, 0
    %59 = vmatprep.subr.bf16.mxu0 0
    %60 = vmatpush1.bf16.msra.mxu0 0
    %61 = vmatprep.subr.bf16.mxu0 0
    %62 = vmatpush1.bf16.msra.mxu0 0
    %63 = vmatprep.subr.bf16.mxu0 0
    %64 = vmatpush1.bf16.msra.mxu0 0
    %65 = vmatprep.subr.bf16.mxu0 0
    %66 = vmatpush1.bf16.msra.mxu0 0
    %67 = vmatprep.subr.bf16.mxu0 0
    %68 = vmatpush1.bf16.msra.mxu0 0
    %69 = vmatprep.subr.bf16.mxu0 0
    %70 = vmatpush1.bf16.msra.mxu0 0
    %71 = vmatprep.subr.bf16.mxu0 0
    %72 = vmatpush1.bf16.msra.mxu0 %v52
    %73 = vmatprep.subr.bf16.mxu0 0
    %74 = vmatpush1.bf16.msra.mxu0 %v51
    %75 = vmatprep.subr.bf16.mxu0 0
    %76 = vmatpush2.bf16.msra.mxu0 0
    %77 = vmatprep.subr.bf16.mxu0 0
    %78 = vmatpush2.bf16.msra.mxu0 0
    %79 = vmatprep.subr.bf16.mxu0 0
    %80 = vmatpush2.bf16.msra.mxu0 0
    %81 = vmatprep.subr.bf16.mxu0 0
    %82 = vmatpush2.bf16.msra.mxu0 0
    %83 = vmatprep.subr.bf16.mxu0 0
    %84 = vmatpush2.bf16.msra.mxu0 0
    %85 = vmatprep.subr.bf16.mxu0 0
    %86 = vmatpush2.bf16.msra.mxu0 0
    %87 = vmatprep.subr.bf16.mxu0 0
    %88 = vmatpush2.bf16.msra.mxu0 0
    %89 = vmatprep.subr.bf16.mxu0 0
    %90 = vmatpush2.bf16.msra.mxu0 0
    %91 = vmatprep.mubr.bf16.mxu0 0
    %92 = vmatmul.mubr.bf16.gmra.mxu0 %v57
    %v93 = vpop.f32.mrf.mxu0
    %v94 = vadd.f32 0.0, %v93
    %v95 = vpop.f32.mrf.mxu0
    %v96 = vpop.f32.mrf.mxu0
    %v97 = vpop.f32.mrf.mxu0
    %98 = vdwg.mxu0
    %v99 = vadd.f32 %v38, %v94
    %v100 = vxor.u32 %v99, 2147483648
    %v101 = vmul.f32 %v100, 1.442695
    %v102 = vpow.pop %v101
    %v103 = vadd.f32 %v102, 1.0
    %v104 = vrcp.pop %v103
    %v105 = vmul.f32 1.0, %v104
    %v106 = vtanh.pop %v99
    %v107 = vmul.f32 %v105, %v35
    %109 = vrot.lane.b32.xlu0 %v106, 64
    %v110 = vpop.permute.xlu0 %109
    %v112 = vmul.f32 %v105, %v110
    %114 = vrot.lane.b32.xlu0 %v112, 32
    %v115 = vpop.permute.xlu0 %114
    %v117 = vadd.f32 %v107, %v115
    %v118 = vtanh.pop %v117
    %120 = vrot.lane.b32.xlu0 %v118, 64
    %v121 = vpop.permute.xlu0 %120
    %v123 = vmul.f32 %v105, %v121
    %v124 = vstv %s29
    %vm125 = vcmp.gt.s32.totalorder %v23, %v124
    %v126 = vsel %vm125, 1, 0
    %127 = vset.pattern.permute.xlu0 0
    %128 = vperm.xlu0 %127, %v126
    %v129 = vpop.permute.xlu0 %128
    %vm130 = vcmp.eq.s32.totalorder %v129, 1
    %v131 = vsel %vm130, %v123, %v34
    %v132 = vsel %vm130, %v117, %v35
    %134 = vrot.lane.b32.xlu0 %v131, 32
    %v135 = vpop.permute.xlu0 %134
    %s137 = scalar_lea.vmem [#allocation2], %s36
    %138 = vst.msk [vmem:[%s137] sm:$0xff] %vm55, %v135
  $region26: #{rlmodel_forward.12} parent=0 // loop_footer
    %s33 = sadd.s32 1, %s29
  $region27: #{rlmodel_forward.12} parent=0 // loop_footer_branch
    %28 = sbr.rel target = $region23
  $region28: #{rlmodel_forward.12} parent=0 // loop_exit
    _
  %v139 = vld [vmem:[#allocation2] sm:$0xff]
  %v140 = vld [vmem:[#allocation2 + $0x8] sm:$0xff]
  %v141 = vld [vmem:[#allocation2 + $0x10] sm:$0xff]
  %v142 = vld [vmem:[%s3] sm:$0x1]
  %v144 = vlaneseq
  %v145 = vshrl.u32 %v144, 7
  %v146 = vsub.s32 0, %v145
  %v147 = vrot.slane %v142, %v146
  %v149 = vmul.f32 %v139, %v147
  %v150 = vmul.f32 %v140, %v147
  %v151 = vmul.f32 %v141, %v147
  %vm152 = vcmask 261120
  %v153 = vsel %vm152, %v149, 0.0
  %154 = vadd.xlane.f32.xlu0 %v153
  %v155 = vpop.xlane.xlu0 %154
  %v156 = vsel %vm152, %v150, 0.0
  %157 = vadd.xlane.f32.xlu0 %v156
  %v158 = vpop.xlane.xlu0 %157
  %v159 = vsel %vm152, %v151, 0.0
  %160 = vadd.xlane.f32.xlu0 %v159
  %v161 = vpop.xlane.xlu0 %160
  %v162 = vld [vmem:[#allocation3] sm:$0x1]
  %v164 = vlaneseq
  %v165 = vshrl.u32 %v164, 7
  %v166 = vsub.s32 0, %v165
  %v167 = vrot.slane %v162, %v166
  %168 = vset.pattern.permute.xlu0 0
  %169 = vperm.xlu0 %168, %v167
  %v170 = vpop.permute.xlu0 %169
  %v172 = vadd.f32 %v155, %v170
  %v173 = vadd.f32 %v158, %v170
  %v174 = vadd.f32 %v161, %v170
  %v175 = vxor.u32 %v172, 2147483648
  %v176 = vxor.u32 %v173, 2147483648
  %v177 = vxor.u32 %v174, 2147483648
  %v178 = vmul.f32 %v175, 1.442695
  %v179 = vpow.pop %v178
  %v180 = vmul.f32 %v176, 1.442695
  %v181 = vpow.pop %v180
  %v182 = vmul.f32 %v177, 1.442695
  %v183 = vpow.pop %v182
  %v184 = vadd.f32 %v179, 1.0
  %v185 = vadd.f32 %v181, 1.0
  %v186 = vadd.f32 %v183, 1.0
  %v187 = vrcp.pop %v184
  %v188 = vmul.f32 1.0, %v187
  %v189 = vrcp.pop %v185
  %v190 = vmul.f32 1.0, %v189
  %v191 = vrcp.pop %v186
  %v192 = vmul.f32 1.0, %v191
  %v193 = vlaneseq
  %v194 = vshrl.u32 %v193, 7
  %195 = vset.pattern.permute.xlu0 0
  %196 = vperm.xlu0 %195, %v23
  %v197 = vpop.permute.xlu0 %196
  %v198 = vlaneseq
  %v199 = vand.u32 %v198, 127
  %v200 = vlaneseq
  %v201 = vshrl.u32 %v200, 7
  %v202 = vsub.s32 %v199, %v201
  %v203 = vrot.slane %v197, %v202
  %vm204 = vcmask 1041409
  %vm205 = vcmask 1042434
  %v206 = vsel %vm205, %v203, %v203
  %vm207 = vcmp.lt.s32.totalorder %v194, %v206
  %vm208 = vcmp.ge.f32.partialorder %v188, 0.5
  %vm209 = vcmp.ge.f32.partialorder %v190, 0.5
  %vm210 = vcmp.ge.f32.partialorder %v192, 0.5
  %v211 = vsel %vm207, 1, 0
  %v212 = vlaneseq
  %v213 = vshrl.u32 %v212, 7
  %v214 = vsub.s32 0, %v213
  %v215 = vrot.slane %v211, %v214
  %217 = vbcast.lane.b32.xlu0 %v215, 256
  %v218 = vpop.permute.xlu0 %217
  %v219 = vlaneseq
  %v220 = vshrl.u32 %v219, 7
  %v221 = vsub.s32 1, %v220
  %v222 = vrot.slane %v211, %v221
  %224 = vbcast.lane.b32.xlu0 %v222, 256
  %v225 = vpop.permute.xlu0 %224
  %v226 = vlaneseq
  %v227 = vshrl.u32 %v226, 7
  %v228 = vsub.s32 2, %v227
  %v229 = vrot.slane %v211, %v228
  %231 = vbcast.lane.b32.xlu0 %v229, 256
  %v232 = vpop.permute.xlu0 %231
  %vm233 = vcmp.ne.s32.totalorder %v218, 0
  %vm234 = vcmp.ne.s32.totalorder %v225, 0
  %vm235 = vcmp.ne.s32.totalorder %v232, 0
  %vm236 = vmand %vm208, %vm233
  %vm237 = vmand %vm209, %vm234
  %vm238 = vmand %vm210, %vm235
  %v239 = vsel %vm236, 1, 0
  %v240 = vsel %vm237, 1, 0
  %v241 = vsel %vm238, 1, 0
  %v242 = vcvt.s32.f32 %v239
  %v243 = vcvt.s32.f32 %v240
  %v244 = vcvt.s32.f32 %v241
  %248 = vset.pattern.permute.xlu0 0
  %249 = vperm.xlu0 %248, %v242
  %v250 = vpop.permute.xlu0 %249
  %251 = vset.pattern.permute.xlu0 0
  %252 = vperm.xlu0 %251, %v243
  %v253 = vpop.permute.xlu0 %252
  %254 = vset.pattern.permute.xlu0 0
  %255 = vperm.xlu0 %254, %v244
  %v256 = vpop.permute.xlu0 %255
  %v257 = vlaneseq
  %v258 = vshrl.u32 %v257, 7
  %v259 = vsub.s32 %v199, %v258
  %v260 = vrot.slane %v250, %v259
  %v261 = vlaneseq
  %v262 = vshrl.u32 %v261, 7
  %v263 = vsub.s32 %v199, %v262
  %v264 = vrot.slane %v253, %v263
  %v265 = vlaneseq
  %v266 = vshrl.u32 %v265, 7
  %v267 = vsub.s32 %v199, %v266
  %v268 = vrot.slane %v256, %v267
  %v269 = vsel %vm204, %v264, %v260
  %v270 = vsel %vm205, %v268, %v269
  %vm272 = vcmask 59392
  %273 = vst.msk [vmem:[%s5] sm:$0x7] %vm272, %v270
  // Predicated region
  $region29: #{rlmodel_forward.12} parent=0 // pred_check
    _
  $region30: #{rlmodel_forward.12} parent=0 // pred_check_branch
    %275 = sbr.rel (0) target = $region32
  $region31: #{rlmodel_forward.12} parent=0 // pred_region
    _
  $region32: #{rlmodel_forward.12} parent=0 // pred_fallthru
    _
  // Predicated region
  $region33: #{rlmodel_forward.12} parent=0 // pred_check
    _
  $region34: #{rlmodel_forward.12} parent=0 // pred_check_branch
    %277 = sbr.rel (0) target = $region36
  $region35: #{rlmodel_forward.12} parent=0 // pred_region
    _
  $region36: #{rlmodel_forward.12} parent=0 // pred_fallthru
    _

// kernel: rlmodel_forward.15
$region0: #{rlmodel_forward.15}
  #allocation0 [shape = 'u32[]', space=smem, size = 0x4, offset = 0x4, fixed_abs, tag = 'smem constant byte address 0x4 - core index']
  #allocation1 [shape = 'u32[144,128]{1,0:T(1,128)}', space=vmem, size = 0x12000, scoped, tag = 'internal scratch']
  %s0 = inlined_call_operand.vmem [shape: s32[8,1], index: 0, kind: input, shape index: {}]
  %s1 = inlined_call_operand.vmem [shape: f32[3,8,128], index: 1, kind: input, shape index: {}]
  %s2 = inlined_call_operand.vmem [shape: bf16[32,128], index: 2, kind: input, shape index: {}]
  %s3 = inlined_call_operand.vmem [shape: f32[32,5], index: 3, kind: input, shape index: {}]
  %s4 = inlined_call_operand.vmem [shape: f32[1,5], index: 4, kind: input, shape index: {}]
  %s5 = inlined_call_operand.vmem [shape: f32[8,5], index: 5, kind: output, shape index: {}]
  %s6 = sld [smem:[#allocation0]]
  $region37: #{rlmodel_forward.15} parent=0
    _
  %s8 = ssub.s32 1, %s6
  %s9 = scalar_select 0, %s8, %s6
  // Predicated region
  $region2: #{rlmodel_forward.15} parent=0 // pred_check
    _
  $region3: #{rlmodel_forward.15} parent=0 // pred_check_branch
    %11 = sbr.rel (0) target = $region5
  $region4: #{rlmodel_forward.15} parent=0 // pred_region
    _
  $region5: #{rlmodel_forward.15} parent=0 // pred_fallthru
    _
  // Predicated region
  $region6: #{rlmodel_forward.15} parent=0 // pred_check
    _
  $region7: #{rlmodel_forward.15} parent=0 // pred_check_branch
    %13 = sbr.rel (0) target = $region9
  $region8: #{rlmodel_forward.15} parent=0 // pred_region
    _
  $region9: #{rlmodel_forward.15} parent=0 // pred_fallthru
    _
  // Predicated region
  $region10: #{rlmodel_forward.15} parent=0 // pred_check
    _
  $region11: #{rlmodel_forward.15} parent=0 // pred_check_branch
    %15 = sbr.rel (0) target = $region13
  $region12: #{rlmodel_forward.15} parent=0 // pred_region
    _
  $region13: #{rlmodel_forward.15} parent=0 // pred_fallthru
    _
  // Predicated region
  $region14: #{rlmodel_forward.15} parent=0 // pred_check
    _
  $region15: #{rlmodel_forward.15} parent=0 // pred_check_branch
    %17 = sbr.rel (0) target = $region17
  $region16: #{rlmodel_forward.15} parent=0 // pred_region
    _
  $region17: #{rlmodel_forward.15} parent=0 // pred_fallthru
    _
  // Predicated region
  $region18: #{rlmodel_forward.15} parent=0 // pred_check
    _
  $region19: #{rlmodel_forward.15} parent=0 // pred_check_branch
    %19 = sbr.rel (0) target = $region21
  $region20: #{rlmodel_forward.15} parent=0 // pred_region
    _
  $region21: #{rlmodel_forward.15} parent=0 // pred_fallthru
    _
  %v21 = vld [vmem:[%s0] sm:$0xff]
  %v22 = vld [vmem:[%s2] sm:$0xf]
  %v23 = vld [vmem:[%s2 + $0x4] sm:$0xf]
  %v24 = vld [vmem:[%s2 + $0x8] sm:$0xf]
  %v25 = vld [vmem:[%s2 + $0xc] sm:$0xf]
  loop: start=0, step=1, limit=3
  $region22: #{rlmodel_forward.15} parent=0 // loop_pre_header
    _
  $region23: #{rlmodel_forward.15} parent=0 // loop_header
    %s27 = sphi 0, %s31
    %p28 = scmp.ge.s32.totalorder %s27, 3
    %v32 = vphi 0.0, %v129
    %v33 = vphi 0.0, %v130
  $region24: #{rlmodel_forward.15} parent=0 // loop_header_branch
    %30 = sbr.rel (%p28) target = $region28
  $region25: #{rlmodel_forward.15} parent=0 // loop_body
    %s34 = smul.u32 %s27, 8
    %s35 = scalar_lea.vmem %s1, %s34
    %v36 = vld [vmem:[%s35] sm:$0xff]
    %v37 = vpack.c.bf16 %v32, %v32
    %39 = vrot.lane.b32.xlu0 %v37, 32
    %v40 = vpop.permute.xlu0 %39
    %v45 = vunpack.c.l.b16 %v22
    %v46 = vunpack.c.l.b16 %v23
    %v47 = vunpack.c.l.b16 %v24
    %v48 = vunpack.c.l.b16 %v25
    %v49 = vpack.c.b16 %v46, %v45
    %v50 = vpack.c.b16 %v48, %v47
    %vm53 = vcmask 261120
    %v55 = vsel %vm53, %v40, 0
    %57 = vmatprep.subr.bf16.mxu0 0
    %58 = vmatpush1.bf16.msra.mxu0 0
    %59 = vmatprep.subr.bf16.mxu0 0
    %60 = vmatpush1.bf16.msra.mxu0 0
    %61 = vmatprep.subr.bf16.mxu0 0
    %62 = vmatpush1.bf16.msra.mxu0 0
    %63 = vmatprep.subr.bf16.mxu0 0
    %64 = vmatpush1.bf16.msra.mxu0 0
    %65 = vmatprep.subr.bf16.mxu0 0
    %66 = vmatpush1.bf16.msra.mxu0 0
    %67 = vmatprep.subr.bf16.mxu0 0
    %68 = vmatpush1.bf16.msra.mxu0 0
    %69 = vmatprep.subr.bf16.mxu0 0
    %70 = vmatpush1.bf16.msra.mxu0 %v50
    %71 = vmatprep.subr.bf16.mxu0 0
    %72 = vmatpush1.bf16.msra.mxu0 %v49
    %73 = vmatprep.subr.bf16.mxu0 0
    %74 = vmatpush2.bf16.msra.mxu0 0
    %75 = vmatprep.subr.bf16.mxu0 0
    %76 = vmatpush2.bf16.msra.mxu0 0
    %77 = vmatprep.subr.bf16.mxu0 0
    %78 = vmatpush2.bf16.msra.mxu0 0
    %79 = vmatprep.subr.bf16.mxu0 0
    %80 = vmatpush2.bf16.msra.mxu0 0
    %81 = vmatprep.subr.bf16.mxu0 0
    %82 = vmatpush2.bf16.msra.mxu0 0
    %83 = vmatprep.subr.bf16.mxu0 0
    %84 = vmatpush2.bf16.msra.mxu0 0
    %85 = vmatprep.subr.bf16.mxu0 0
    %86 = vmatpush2.bf16.msra.mxu0 0
    %87 = vmatprep.subr.bf16.mxu0 0
    %88 = vmatpush2.bf16.msra.mxu0 0
    %89 = vmatprep.mubr.bf16.mxu0 0
    %90 = vmatmul.mubr.bf16.gmra.mxu0 %v55
    %v91 = vpop.f32.mrf.mxu0
    %v92 = vadd.f32 0.0, %v91
    %v93 = vpop.f32.mrf.mxu0
    %v94 = vpop.f32.mrf.mxu0
    %v95 = vpop.f32.mrf.mxu0
    %96 = vdwg.mxu0
    %v97 = vadd.f32 %v36, %v92
    %v98 = vxor.u32 %v97, 2147483648
    %v99 = vmul.f32 %v98, 1.442695
    %v100 = vpow.pop %v99
    %v101 = vadd.f32 %v100, 1.0
    %v102 = vrcp.pop %v101
    %v103 = vmul.f32 1.0, %v102
    %v104 = vtanh.pop %v97
    %v105 = vmul.f32 %v103, %v33
    %107 = vrot.lane.b32.xlu0 %v104, 64
    %v108 = vpop.permute.xlu0 %107
    %v110 = vmul.f32 %v103, %v108
    %112 = vrot.lane.b32.xlu0 %v110, 32
    %v113 = vpop.permute.xlu0 %112
    %v115 = vadd.f32 %v105, %v113
    %v116 = vtanh.pop %v115
    %118 = vrot.lane.b32.xlu0 %v116, 64
    %v119 = vpop.permute.xlu0 %118
    %v121 = vmul.f32 %v103, %v119
    %v122 = vstv %s27
    %vm123 = vcmp.gt.s32.totalorder %v21, %v122
    %v124 = vsel %vm123, 1, 0
    %125 = vset.pattern.permute.xlu0 0
    %126 = vperm.xlu0 %125, %v124
    %v127 = vpop.permute.xlu0 %126
    %vm128 = vcmp.eq.s32.totalorder %v127, 1
    %v129 = vsel %vm128, %v121, %v32
    %v130 = vsel %vm128, %v115, %v33
  $region26: #{rlmodel_forward.15} parent=0 // loop_footer
    %s31 = sadd.s32 1, %s27
  $region27: #{rlmodel_forward.15} parent=0 // loop_footer_branch
    %26 = sbr.rel target = $region23
  $region28: #{rlmodel_forward.15} parent=0 // loop_exit
    _
  %v131 = vld [vmem:[%s3] sm:$0xff]
  %v132 = vld [vmem:[%s3 + $0x8] sm:$0xff]
  %v133 = vld [vmem:[%s3 + $0x10] sm:$0xff]
  %v134 = vld [vmem:[%s3 + $0x18] sm:$0xff]
  %v135 = vld [vmem:[%s4] sm:$0x1]
  %v137 = vlaneseq
  %v138 = vshrl.u32 %v137, 7
  %v139 = vsub.s32 0, %v138
  %v140 = vrot.slane %v135, %v139
  %143 = vrot.lane.b32.xlu0 %v32, 32
  %v144 = vpop.permute.xlu0 %143
  %vm145 = vcmask 261120
  %v146 = vsel %vm145, %v144, 0
  %148 = vmatprep.subr.mxu0 0.0
  %149 = vmatpush1.msra.mxu0 0.0
  %150 = vmatprep.subr.mxu0 0.0
  %151 = vmatpush1.msra.mxu0 0.0
  %152 = vmatprep.subr.mxu0 0.0
  %153 = vmatpush1.msra.mxu0 0.0
  %154 = vmatprep.subr.mxu0 0.0
  %155 = vmatpush1.msra.mxu0 0.0
  %156 = vmatprep.subr.mxu0 0.0
  %157 = vmatpush1.msra.mxu0 0.0
  %158 = vmatprep.subr.mxu0 0.0
  %159 = vmatpush1.msra.mxu0 0.0
  %160 = vmatprep.subr.mxu0 0.0
  %161 = vmatpush1.msra.mxu0 0.0
  %162 = vmatprep.subr.mxu0 0.0
  %163 = vmatpush1.msra.mxu0 0.0
  %164 = vmatprep.subr.mxu0 0.0
  %165 = vmatpush1.msra.mxu0 0.0
  %166 = vmatprep.subr.mxu0 0.0
  %167 = vmatpush1.msra.mxu0 0.0
  %168 = vmatprep.subr.mxu0 0.0
  %169 = vmatpush1.msra.mxu0 0.0
  %170 = vmatprep.subr.mxu0 0.0
  %171 = vmatpush1.msra.mxu0 0.0
  %172 = vmatprep.subr.mxu0 0.0
  %173 = vmatpush1.msra.mxu0 %v134
  %174 = vmatprep.subr.mxu0 0.0
  %175 = vmatpush1.msra.mxu0 %v133
  %176 = vmatprep.subr.mxu0 0.0
  %177 = vmatpush1.msra.mxu0 %v132
  %178 = vmatprep.subr.mxu0 0.0
  %179 = vmatpush1.msra.mxu0 %v131
  %180 = vmatprep.subr.mxu0 0.0
  %181 = vmatpush2.msra.mxu0 0.0
  %182 = vmatprep.subr.mxu0 0.0
  %183 = vmatpush2.msra.mxu0 0.0
  %184 = vmatprep.subr.mxu0 0.0
  %185 = vmatpush2.msra.mxu0 0.0
  %186 = vmatprep.subr.mxu0 0.0
  %187 = vmatpush2.msra.mxu0 0.0
  %188 = vmatprep.subr.mxu0 0.0
  %189 = vmatpush2.msra.mxu0 0.0
  %190 = vmatprep.subr.mxu0 0.0
  %191 = vmatpush2.msra.mxu0 0.0
  %192 = vmatprep.subr.mxu0 0.0
  %193 = vmatpush2.msra.mxu0 0.0
  %194 = vmatprep.subr.mxu0 0.0
  %195 = vmatpush2.msra.mxu0 0.0
  %196 = vmatprep.subr.mxu0 0.0
  %197 = vmatpush2.msra.mxu0 0.0
  %198 = vmatprep.subr.mxu0 0.0
  %199 = vmatpush2.msra.mxu0 0.0
  %200 = vmatprep.subr.mxu0 0.0
  %201 = vmatpush2.msra.mxu0 0.0
  %202 = vmatprep.subr.mxu0 0.0
  %203 = vmatpush2.msra.mxu0 0.0
  %204 = vmatprep.subr.mxu0 0.0
  %205 = vmatpush2.msra.mxu0 0.0
  %206 = vmatprep.subr.mxu0 0.0
  %207 = vmatpush2.msra.mxu0 0.0
  %208 = vmatprep.subr.mxu0 0.0
  %209 = vmatpush2.msra.mxu0 0.0
  %210 = vmatprep.subr.mxu0 0.0
  %211 = vmatpush2.msra.mxu0 0.0
  %212 = vmatprep.mubr.f32.mxu0 0.0
  %213 = vmatmul.mubr.f32.gmra.mxu0 %v146
  %v214 = vpop.f32.mrf.mxu0
  %v215 = vadd.f32 %v140, %v214
  %v216 = vpop.f32.mrf.mxu0
  %217 = vdwg.mxu0
  %v218 = vxor.u32 %v215, 2147483648
  %v219 = vmul.f32 %v218, 1.442695
  %v220 = vpow.pop %v219
  %v221 = vadd.f32 %v220, 1.0
  %v222 = vrcp.pop %v221
  %v223 = vmul.f32 1.0, %v222
  %vm224 = vcmask 39936
  %225 = vst.msk [vmem:[%s5] sm:$0xff] %vm224, %v223
  // Predicated region
  $region29: #{rlmodel_forward.15} parent=0 // pred_check
    _
  $region30: #{rlmodel_forward.15} parent=0 // pred_check_branch
    %227 = sbr.rel (0) target = $region32
  $region31: #{rlmodel_forward.15} parent=0 // pred_region
    _
  $region32: #{rlmodel_forward.15} parent=0 // pred_fallthru
    _
  // Predicated region
  $region33: #{rlmodel_forward.15} parent=0 // pred_check
    _
  $region34: #{rlmodel_forward.15} parent=0 // pred_check_branch
    %229 = sbr.rel (0) target = $region36
  $region35: #{rlmodel_forward.15} parent=0 // pred_region
    _
  $region36: #{rlmodel_forward.15} parent=0 // pred_fallthru
    _

</llo_original>
